<compile_context>
chip_gen: v7x
topology: tpu7x:2x2x1
jax: 0.10.0
libtpu: 0.0.40
codegen_flags: <defaults>
</compile_context>

<pallas_src>
import functools

import jax
import jax.numpy as jnp
from jax.experimental import pallas as pl
from jax.experimental.pallas import tpu as pltpu


def _round_up(v, m):
    return ((v + m - 1) // m) * m


def _pick_row_tile(n_p):
    # Review suggests ~256-512 rows per adj tile; must divide the 128-padded N.
    for cand in (512, 256, 128):
        if n_p % cand == 0:
            return cand
    return n_p


def _vmem_limit_bytes(per_call_bytes):
    """Explicit scoped-VMEM budget from the padded footprint, clamped per chip."""
    try:
        cap = int(pltpu.get_tpu_info().vmem_capacity_bytes)
    except Exception:  # be conservative if the query is unavailable
        cap = 64 * 1024 * 1024  # v7x per-TensorCore physical VMEM
    want = 3 * per_call_bytes + (8 << 20)  # double-buffers + f32 temporaries + margin
    return int(min(max(want, 32 << 20), int(0.8 * cap)))


# --------------------------------------------------------------------------- kernels


def _proj1_kernel(x_ref, w1_ref, o_ref):
    """xw1cat[tile] = x[tile] @ [W_l1 | W_r1]  (bf16 operands, f32 accumulate)."""
    o_ref[...] = jnp.dot(x_ref[...], w1_ref[...],
                         preferred_element_type=jnp.float32).astype(o_ref.dtype)


def _layer1_kernel(adj_ref, xwn_ref, xws_ref, b1_ref, w2_ref, o_ref):
    """h[tile] = relu(mean_nbr(x) @ W_l1 + x @ W_r1 + b1); out = [h @ W_l2 | h @ W_r2]."""
    adj = adj_ref[...]                                                  # [tm, N] bf16 (0/1 exact)
    # Per-tile degree with f32 accumulation (no full f32 adj materialization).
    deg = jnp.sum(adj, axis=-1, keepdims=True, dtype=jnp.float32)       # [tm, 1]
    deg_inv = 1.0 / jnp.maximum(deg, 1.0)   # exact vs where(deg>0): zero-deg rows agg to 0
    # Reordered neighbor term: deg_inv * (adj @ (x @ W_l1)) — adj matmul carries the
    # small feature width.
    agg = jnp.dot(adj, xwn_ref[...], preferred_element_type=jnp.float32) * deg_inv
    h = jnp.maximum(agg + xws_ref[...].astype(jnp.float32) + b1_ref[...], 0.0)
    # F.dropout is identity in eval mode.
    # Fused layer-2 projection of this row tile (one dot: concatenated W2).
    o_ref[...] = jnp.dot(h.astype(jnp.bfloat16), w2_ref[...],
                         preferred_element_type=jnp.float32).astype(o_ref.dtype)


def _layer2_kernel(adj_ref, hn_ref, hs_ref, b2_ref, o_ref):
    """out[tile] = mean_nbr(h) @ W_l2 + h @ W_r2 + b2  (projections precomputed)."""
    adj = adj_ref[...]                                                  # [tm, N] bf16
    deg = jnp.sum(adj, axis=-1, keepdims=True, dtype=jnp.float32)
    deg_inv = 1.0 / jnp.maximum(deg, 1.0)
    agg = jnp.dot(adj, hn_ref[...], preferred_element_type=jnp.float32) * deg_inv
    o_ref[...] = (agg + hs_ref[...].astype(jnp.float32) + b2_ref[...]).astype(o_ref.dtype)


# --------------------------------------------------------- one-time prep (hoisted)


def prepare_adjacency(adj):
    """Pad + cast the static transductive adjacency once (0/1 is exact in bf16)."""
    n = adj.shape[0]
    n_p = _round_up(n, 128)
    return jnp.zeros((n_p, n_p), jnp.bfloat16).at[:n, :n].set(adj.astype(jnp.bfloat16))


def prepare_features(x):
    n, f = x.shape
    n_p, f_p = _round_up(n, 128), _round_up(f, 128)
    return jnp.zeros((n_p, f_p), jnp.bfloat16).at[:n, :f].set(x.astype(jnp.bfloat16))


def prepare_params(params):
    """Pad + cast weights once; concatenate per-layer weight pairs along the output dim."""
    nfeat, nhid = params["w_l1"].shape
    nclass = params["w_l2"].shape[1]
    f_p, h_p, c_p = _round_up(nfeat, 128), _round_up(nhid, 128), _round_up(nclass, 128)

    w1 = jnp.zeros((f_p, 2 * h_p), jnp.bfloat16)
    w1 = w1.at[:nfeat, :nhid].set(params["w_l1"].astype(jnp.bfloat16))
    w1 = w1.at[:nfeat, h_p:h_p + nhid].set(params["w_r1"].astype(jnp.bfloat16))

    w2 = jnp.zeros((h_p, 2 * c_p), jnp.bfloat16)
    w2 = w2.at[:nhid, :nclass].set(params["w_l2"].astype(jnp.bfloat16))
    w2 = w2.at[:nhid, c_p:c_p + nclass].set(params["w_r2"].astype(jnp.bfloat16))

    b1 = jnp.zeros((1, h_p), jnp.float32).at[:, :nhid].set(params["b1"].astype(jnp.float32))
    b2 = jnp.zeros((1, c_p), jnp.float32).at[:, :nclass].set(params["b2"].astype(jnp.float32))
    return {"w1cat": w1, "b1": b1, "w2cat": w2, "b2": b2}


# ------------------------------------------------------------------------- forward


@functools.partial(jax.jit, static_argnames=("n", "nclass"))
def graphsage2_forward_padded(xp, adjp, pp, *, n, nclass):
    """GraphSAGE2 eval-mode forward on pre-padded bf16 inputs."""
    n_p, f_p = xp.shape
    two_h = pp["w1cat"].shape[1]
    h_p = two_h // 2
    two_c = pp["w2cat"].shape[1]
    c_p = two_c // 2
    tm = _pick_row_tile(n_p)
    nt = n_p // tm

    # Rough per-call VMEM footprint (largest is the layer-1 call): streamed tiles are
    # double-buffered, pinned operands counted twice for safety, plus f32 temporaries.
    fp_b = (2 * tm * n_p * 2          # adj row tile (bf16, double buffered)
            + 2 * n_p * h_p * 2       # pinned xw1 neighbor projection
            + 2 * tm * h_p * 2        # xw1 self tile
            + 2 * h_p * two_c * 2     # pinned W2cat
            + 2 * tm * two_c * 2      # output tile
            + tm * n_p * 4            # f32 temp for the degree reduce
            + 4 * tm * h_p * 4)       # f32 temporaries (agg, h, ...)
    cp = pltpu.CompilerParams(dimension_semantics=("parallel",),
                              vmem_limit_bytes=_vmem_limit_bytes(fp_b))

    # Phase 0: xw1cat = x @ [W_l1 | W_r1]   (needed in full before the adj matmul).
    xw1cat = pl.pallas_call(
        _proj1_kernel,
        out_shape=jax.ShapeDtypeStruct((n_p, two_h), jnp.bfloat16),
        grid=(nt,),
        in_specs=[pl.BlockSpec((tm, f_p), lambda i: (i, 0)),
                  pl.BlockSpec((f_p, two_h), lambda i: (0, 0))],
        out_specs=pl.BlockSpec((tm, two_h), lambda i: (i, 0)),
        compiler_params=cp,
    )(xp, pp["w1cat"])

    # Phase 1: stream adj row tiles; h = relu(mean_nbr + self + b1);
    #          fused layer-2 projection hcat2 = [h @ W_l2 | h @ W_r2].
    hcat2 = pl.pallas_call(
        _layer1_kernel,
        out_shape=jax.ShapeDtypeStruct((n_p, two_c), jnp.bfloat16),
        grid=(nt,),
        in_specs=[pl.BlockSpec((tm, n_p), lambda i: (i, 0)),      # adj rows (streamed)
                  pl.BlockSpec((n_p, h_p), lambda i: (0, 0)),     # xw1 neighbor half (pinned)
                  pl.BlockSpec((tm, h_p), lambda i: (i, 1)),      # xw1 self half, this tile
                  pl.BlockSpec((1, h_p), lambda i: (0, 0)),       # b1
                  pl.BlockSpec((h_p, two_c), lambda i: (0, 0))],  # W2cat (pinned)
        out_specs=pl.BlockSpec((tm, two_c), lambda i: (i, 0)),
        compiler_params=cp,
    )(adjp, xw1cat, xw1cat, pp["b1"], pp["w2cat"])

    # Phase 2: re-stream adj row tiles; out = mean_nbr(h) @ W_l2 + h @ W_r2 + b2.
    out_p = pl.pallas_call(
        _layer2_kernel,
        out_shape=jax.ShapeDtypeStruct((n_p, c_p), jnp.float32),
        grid=(nt,),
        in_specs=[pl.BlockSpec((tm, n_p), lambda i: (i, 0)),      # adj rows (streamed)
                  pl.BlockSpec((n_p, c_p), lambda i: (0, 0)),     # h@W_l2 (pinned)
                  pl.BlockSpec((tm, c_p), lambda i: (i, 1)),      # h@W_r2, this tile
                  pl.BlockSpec((1, c_p), lambda i: (0, 0))],      # b2
        out_specs=pl.BlockSpec((tm, c_p), lambda i: (i, 0)),
        compiler_params=cp,
    )(adjp, hcat2, hcat2, pp["b2"])

    return out_p[:n, :nclass]


def graphsage2_forward(x, adj, params):
    """Convenience wrapper (pads every call). Prefer the hoisted prepare_* path."""
    n = x.shape[0]
    nclass = params["w_l2"].shape[1]
    return graphsage2_forward_padded(prepare_features(x), prepare_adjacency(adj),
                                     prepare_params(params), n=n, nclass=nclass)


# ----------------------------------------------------------------------- reference


def init_params(key, nfeat, nhid, nclass):
    k1, k2, k3, k4 = jax.random.split(key, 4)

    def glorot(k, fan_in, fan_out):
        limit = jnp.sqrt(6.0 / (fan_in + fan_out))
        return jax.random.uniform(k, (fan_in, fan_out), jnp.float32, -limit, limit)

    return {
        "w_l1": glorot(k1, nfeat, nhid),
        "w_r1": glorot(k2, nfeat, nhid),
        "b1": jnp.zeros((1, nhid), jnp.float32),
        "w_l2": glorot(k3, nhid, nclass),
        "w_r2": glorot(k4, nhid, nclass),
        "b2": jnp.zeros((1, nclass), jnp.float32),
        "dropout": 0.5,
    }


def reference_forward(x, adj, params):
    """Pure-JAX f32 reference (matches the PyTorch module's eval-mode forward)."""
    deg = jnp.sum(adj, axis=1, keepdims=True)
    deg_inv = jnp.where(deg > 0, 1.0 / deg, 0.0)

    def layer(h, wl, wr, b):
        neigh = (adj @ h) * deg_inv
        return neigh @ wl + h @ wr + b

    h = jax.nn.relu(layer(x, params["w_l1"], params["w_r1"], params["b1"]))
    return layer(h, params["w_l2"], params["w_r2"], params["b2"])


if __name__ == "__main__":
    key = jax.random.PRNGKey(0)
    k_x, k_adj, k_p = jax.random.split(key, 3)

    # small transductive graph: N nodes, nfeat input features
    N, nfeat, nhid, nclass = 16, 32, 32, 8

    x = jax.random.normal(k_x, (N, nfeat), jnp.float32)
    # random symmetric adjacency with self-loops
    a = (jax.random.uniform(k_adj, (N, N)) < 0.3).astype(jnp.float32)
    adj = jnp.maximum(a, a.T)
    adj = jnp.maximum(adj, jnp.eye(N, dtype=jnp.float32))

    params = init_params(k_p, nfeat, nhid, nclass)

    # One-time (hoisted) padding / bf16 casting: adj is static in the transductive
    # setting and weights only change at optimizer steps.
    xp = prepare_features(x)
    adjp = prepare_adjacency(adj)
    pp = prepare_params(params)

    out = graphsage2_forward_padded(xp, adjp, pp, n=N, nclass=nclass)
    out = jax.block_until_ready(out)

    ref = reference_forward(x, adj, params)
    assert out.shape == (N, nclass)
    # adj is exact in bf16; x / weights / intermediate projections are bf16 with f32
    # accumulation -> slightly loosened tolerance vs the pure-f32 reference.
    err = float(jnp.max(jnp.abs(out - ref)))
    assert jnp.allclose(out, ref, atol=5e-2, rtol=5e-2), err

    print("KERNEL_OK")
</pallas_src>

<mosaic_0001>
module attributes {stable_mosaic.version = 11 : i64} {
  func.func @_proj1_kernel(%arg0: i32, %arg1: memref<128x128xbf16, #tpu.memory_space<vmem>>, %arg2: memref<128x256xbf16, #tpu.memory_space<vmem>>, %arg3: memref<128x256xbf16, #tpu.memory_space<vmem>>) attributes {dimension_semantics = [#tpu.dimension_semantics<parallel>], iteration_bounds = array<i64: 1>, scalar_prefetch = 0 : i64, scratch_operands = 0 : i64, tpu.core_type = #tpu.core_type<tc>, window_params = [{transform_indices = @transform_0, window_bounds = array<i64: 128, 128>}, {pipeline_mode = #tpu.pipeline_mode<synchronous>, transform_indices = @transform_1, window_bounds = array<i64: 128, 256>}, {transform_indices = @transform_2, window_bounds = array<i64: 128, 256>}]} {
    %c0 = arith.constant 0 : index
    %c0_0 = arith.constant 0 : index
    %0 = vector.load %arg1[%c0, %c0_0] : memref<128x128xbf16, #tpu.memory_space<vmem>>, vector<128x128xbf16>
    %c0_1 = arith.constant 0 : index
    %c0_2 = arith.constant 0 : index
    %1 = vector.load %arg2[%c0_1, %c0_2] : memref<128x256xbf16, #tpu.memory_space<vmem>>, vector<128x256xbf16>
    %cst = arith.constant dense<0.000000e+00> : vector<128x256xf32>
    %2 = tpu.matmul %0, %1, %cst {dimension_numbers = #tpu.dot_dimension_numbers<[1], [0], [0], [1], [0, 0, 1, 1], [], []>} : vector<128x128xbf16>, vector<128x256xbf16>, vector<128x256xf32> -> vector<128x256xf32>
    %3 = arith.truncf %2 : vector<128x256xf32> to vector<128x256xbf16>
    %c0_3 = arith.constant 0 : index
    %c0_4 = arith.constant 0 : index
    %4 = vector.load %arg3[%c0_3, %c0_4] : memref<128x256xbf16, #tpu.memory_space<vmem>>, vector<128x256xbf16>
    tpu.vector_store %arg3[%c0_3, %c0_4], %3 {strides = array<i32>} : memref<128x256xbf16, #tpu.memory_space<vmem>>, vector<128x256xbf16>,
    return
  }
  func.func @transform_0(%arg0: i32) -> (i32, i32) {
    %c0_i32 = arith.constant 0 : i32
    %c0_i32_0 = arith.constant 0 : i32
    return %arg0, %c0_i32 : i32, i32
  }
  func.func @transform_1(%arg0: i32) -> (i32, i32) {
    %c0_i32 = arith.constant 0 : i32
    %c0_i32_0 = arith.constant 0 : i32
    %c0_i32_1 = arith.constant 0 : i32
    return %c0_i32, %c0_i32_0 : i32, i32
  }
  func.func @transform_2(%arg0: i32) -> (i32, i32) {
    %c0_i32 = arith.constant 0 : i32
    %c0_i32_0 = arith.constant 0 : i32
    return %arg0, %c0_i32 : i32, i32
  }
}

module attributes {stable_mosaic.version = 11 : i64} {
  func.func @_layer1_kernel(%arg0: i32, %arg1: memref<128x128xbf16, #tpu.memory_space<vmem>>, %arg2: memref<128x128xbf16, #tpu.memory_space<vmem>>, %arg3: memref<128x128xbf16, #tpu.memory_space<vmem>>, %arg4: memref<1x128xf32, #tpu.memory_space<vmem>>, %arg5: memref<128x256xbf16, #tpu.memory_space<vmem>>, %arg6: memref<128x256xbf16, #tpu.memory_space<vmem>>) attributes {dimension_semantics = [#tpu.dimension_semantics<parallel>], iteration_bounds = array<i64: 1>, scalar_prefetch = 0 : i64, scratch_operands = 0 : i64, tpu.core_type = #tpu.core_type<tc>, window_params = [{transform_indices = @transform_0, window_bounds = array<i64: 128, 128>}, {transform_indices = @transform_1, window_bounds = array<i64: 128, 128>}, {transform_indices = @transform_2, window_bounds = array<i64: 128, 128>}, {pipeline_mode = #tpu.pipeline_mode<synchronous>, transform_indices = @transform_3, window_bounds = array<i64: 1, 128>}, {pipeline_mode = #tpu.pipeline_mode<synchronous>, transform_indices = @transform_4, window_bounds = array<i64: 128, 256>}, {transform_indices = @transform_5, window_bounds = array<i64: 128, 256>}]} {
    %c0 = arith.constant 0 : index
    %c0_0 = arith.constant 0 : index
    %0 = vector.load %arg1[%c0, %c0_0] : memref<128x128xbf16, #tpu.memory_space<vmem>>, vector<128x128xbf16>
    %1 = arith.extf %0 : vector<128x128xbf16> to vector<128x128xf32>
    %cst = arith.constant dense<0.000000e+00> : vector<128xf32>
    %2 = vector.multi_reduction <add>, %1, %cst [1] : vector<128x128xf32> to vector<128xf32>
    %3 = vector.shape_cast %2 : vector<128xf32> to vector<128x1xf32>
    %cst_1 = arith.constant 1.000000e+00 : f32
    %4 = vector.broadcast %cst_1 : f32 to vector<128x1xf32>
    %5 = arith.maximumf %3, %4 : vector<128x1xf32>
    %cst_2 = arith.constant 1.000000e+00 : f32
    %6 = vector.broadcast %cst_2 : f32 to vector<128x1xf32>
    %7 = arith.divf %6, %5 : vector<128x1xf32>
    %c0_3 = arith.constant 0 : index
    %c0_4 = arith.constant 0 : index
    %8 = vector.load %arg2[%c0_3, %c0_4] : memref<128x128xbf16, #tpu.memory_space<vmem>>, vector<128x128xbf16>
    %cst_5 = arith.constant dense<0.000000e+00> : vector<128x128xf32>
    %9 = tpu.matmul %0, %8, %cst_5 {dimension_numbers = #tpu.dot_dimension_numbers<[1], [0], [0], [1], [0, 0, 1, 1], [], []>} : vector<128x128xbf16>, vector<128x128xbf16>, vector<128x128xf32> -> vector<128x128xf32>
    %10 = vector.broadcast %7 : vector<128x1xf32> to vector<128x128xf32>
    %11 = arith.mulf %9, %10 : vector<128x128xf32>
    %c0_6 = arith.constant 0 : index
    %c0_7 = arith.constant 0 : index
    %12 = vector.load %arg3[%c0_6, %c0_7] : memref<128x128xbf16, #tpu.memory_space<vmem>>, vector<128x128xbf16>
    %13 = arith.extf %12 : vector<128x128xbf16> to vector<128x128xf32>
    %14 = arith.addf %11, %13 : vector<128x128xf32>
    %c0_8 = arith.constant 0 : index
    %c0_9 = arith.constant 0 : index
    %15 = vector.load %arg4[%c0_8, %c0_9] : memref<1x128xf32, #tpu.memory_space<vmem>>, vector<1x128xf32>
    %16 = vector.broadcast %15 : vector<1x128xf32> to vector<128x128xf32>
    %17 = arith.addf %14, %16 : vector<128x128xf32>
    %cst_10 = arith.constant 0.000000e+00 : f32
    %18 = vector.broadcast %cst_10 : f32 to vector<128x128xf32>
    %19 = arith.maximumf %17, %18 : vector<128x128xf32>
    %20 = arith.truncf %19 : vector<128x128xf32> to vector<128x128xbf16>
    %c0_11 = arith.constant 0 : index
    %c0_12 = arith.constant 0 : index
    %21 = vector.load %arg5[%c0_11, %c0_12] : memref<128x256xbf16, #tpu.memory_space<vmem>>, vector<128x256xbf16>
    %cst_13 = arith.constant dense<0.000000e+00> : vector<128x256xf32>
    %22 = tpu.matmul %20, %21, %cst_13 {dimension_numbers = #tpu.dot_dimension_numbers<[1], [0], [0], [1], [0, 0, 1, 1], [], []>} : vector<128x128xbf16>, vector<128x256xbf16>, vector<128x256xf32> -> vector<128x256xf32>
    %23 = arith.truncf %22 : vector<128x256xf32> to vector<128x256xbf16>
    %c0_14 = arith.constant 0 : index
    %c0_15 = arith.constant 0 : index
    %24 = vector.load %arg6[%c0_14, %c0_15] : memref<128x256xbf16, #tpu.memory_space<vmem>>, vector<128x256xbf16>
    tpu.vector_store %arg6[%c0_14, %c0_15], %23 {strides = array<i32>} : memref<128x256xbf16, #tpu.memory_space<vmem>>, vector<128x256xbf16>,
    return
  }
  func.func @transform_0(%arg0: i32) -> (i32, i32) {
    %c0_i32 = arith.constant 0 : i32
    %c0_i32_0 = arith.constant 0 : i32
    return %arg0, %c0_i32 : i32, i32
  }
  func.func @transform_1(%arg0: i32) -> (i32, i32) {
    %c0_i32 = arith.constant 0 : i32
    %c0_i32_0 = arith.constant 0 : i32
    %c0_i32_1 = arith.constant 0 : i32
    return %c0_i32, %c0_i32_0 : i32, i32
  }
  func.func @transform_2(%arg0: i32) -> (i32, i32) {
    %c1_i32 = arith.constant 1 : i32
    %c0_i32 = arith.constant 0 : i32
    return %arg0, %c1_i32 : i32, i32
  }
  func.func @transform_3(%arg0: i32) -> (i32, i32) {
    %c0_i32 = arith.constant 0 : i32
    %c0_i32_0 = arith.constant 0 : i32
    %c0_i32_1 = arith.constant 0 : i32
    return %c0_i32, %c0_i32_0 : i32, i32
  }
  func.func @transform_4(%arg0: i32) -> (i32, i32) {
    %c0_i32 = arith.constant 0 : i32
    %c0_i32_0 = arith.constant 0 : i32
    %c0_i32_1 = arith.constant 0 : i32
    return %c0_i32, %c0_i32_0 : i32, i32
  }
  func.func @transform_5(%arg0: i32) -> (i32, i32) {
    %c0_i32 = arith.constant 0 : i32
    %c0_i32_0 = arith.constant 0 : i32
    return %arg0, %c0_i32 : i32, i32
  }
}

module attributes {stable_mosaic.version = 11 : i64} {
  func.func @_layer2_kernel(%arg0: i32, %arg1: memref<128x128xbf16, #tpu.memory_space<vmem>>, %arg2: memref<128x128xbf16, #tpu.memory_space<vmem>>, %arg3: memref<128x128xbf16, #tpu.memory_space<vmem>>, %arg4: memref<1x128xf32, #tpu.memory_space<vmem>>, %arg5: memref<128x128xf32, #tpu.memory_space<vmem>>) attributes {dimension_semantics = [#tpu.dimension_semantics<parallel>], iteration_bounds = array<i64: 1>, scalar_prefetch = 0 : i64, scratch_operands = 0 : i64, tpu.core_type = #tpu.core_type<tc>, window_params = [{transform_indices = @transform_0, window_bounds = array<i64: 128, 128>}, {transform_indices = @transform_1, window_bounds = array<i64: 128, 128>}, {transform_indices = @transform_2, window_bounds = array<i64: 128, 128>}, {pipeline_mode = #tpu.pipeline_mode<synchronous>, transform_indices = @transform_3, window_bounds = array<i64: 1, 128>}, {transform_indices = @transform_4, window_bounds = array<i64: 128, 128>}]} {
    %c0 = arith.constant 0 : index
    %c0_0 = arith.constant 0 : index
    %0 = vector.load %arg1[%c0, %c0_0] : memref<128x128xbf16, #tpu.memory_space<vmem>>, vector<128x128xbf16>
    %1 = arith.extf %0 : vector<128x128xbf16> to vector<128x128xf32>
    %cst = arith.constant dense<0.000000e+00> : vector<128xf32>
    %2 = vector.multi_reduction <add>, %1, %cst [1] : vector<128x128xf32> to vector<128xf32>
    %3 = vector.shape_cast %2 : vector<128xf32> to vector<128x1xf32>
    %cst_1 = arith.constant 1.000000e+00 : f32
    %4 = vector.broadcast %cst_1 : f32 to vector<128x1xf32>
    %5 = arith.maximumf %3, %4 : vector<128x1xf32>
    %cst_2 = arith.constant 1.000000e+00 : f32
    %6 = vector.broadcast %cst_2 : f32 to vector<128x1xf32>
    %7 = arith.divf %6, %5 : vector<128x1xf32>
    %c0_3 = arith.constant 0 : index
    %c0_4 = arith.constant 0 : index
    %8 = vector.load %arg2[%c0_3, %c0_4] : memref<128x128xbf16, #tpu.memory_space<vmem>>, vector<128x128xbf16>
    %cst_5 = arith.constant dense<0.000000e+00> : vector<128x128xf32>
    %9 = tpu.matmul %0, %8, %cst_5 {dimension_numbers = #tpu.dot_dimension_numbers<[1], [0], [0], [1], [0, 0, 1, 1], [], []>} : vector<128x128xbf16>, vector<128x128xbf16>, vector<128x128xf32> -> vector<128x128xf32>
    %10 = vector.broadcast %7 : vector<128x1xf32> to vector<128x128xf32>
    %11 = arith.mulf %9, %10 : vector<128x128xf32>
    %c0_6 = arith.constant 0 : index
    %c0_7 = arith.constant 0 : index
    %12 = vector.load %arg3[%c0_6, %c0_7] : memref<128x128xbf16, #tpu.memory_space<vmem>>, vector<128x128xbf16>
    %13 = arith.extf %12 : vector<128x128xbf16> to vector<128x128xf32>
    %14 = arith.addf %11, %13 : vector<128x128xf32>
    %c0_8 = arith.constant 0 : index
    %c0_9 = arith.constant 0 : index
    %15 = vector.load %arg4[%c0_8, %c0_9] : memref<1x128xf32, #tpu.memory_space<vmem>>, vector<1x128xf32>
    %16 = vector.broadcast %15 : vector<1x128xf32> to vector<128x128xf32>
    %17 = arith.addf %14, %16 : vector<128x128xf32>
    %c0_10 = arith.constant 0 : index
    %c0_11 = arith.constant 0 : index
    %18 = vector.load %arg5[%c0_10, %c0_11] : memref<128x128xf32, #tpu.memory_space<vmem>>, vector<128x128xf32>
    tpu.vector_store %arg5[%c0_10, %c0_11], %17 {strides = array<i32>} : memref<128x128xf32, #tpu.memory_space<vmem>>, vector<128x128xf32>,
    return
  }
  func.func @transform_0(%arg0: i32) -> (i32, i32) {
    %c0_i32 = arith.constant 0 : i32
    %c0_i32_0 = arith.constant 0 : i32
    return %arg0, %c0_i32 : i32, i32
  }
  func.func @transform_1(%arg0: i32) -> (i32, i32) {
    %c0_i32 = arith.constant 0 : i32
    %c0_i32_0 = arith.constant 0 : i32
    %c0_i32_1 = arith.constant 0 : i32
    return %c0_i32, %c0_i32_0 : i32, i32
  }
  func.func @transform_2(%arg0: i32) -> (i32, i32) {
    %c1_i32 = arith.constant 1 : i32
    %c0_i32 = arith.constant 0 : i32
    return %arg0, %c1_i32 : i32, i32
  }
  func.func @transform_3(%arg0: i32) -> (i32, i32) {
    %c0_i32 = arith.constant 0 : i32
    %c0_i32_0 = arith.constant 0 : i32
    %c0_i32_1 = arith.constant 0 : i32
    return %c0_i32, %c0_i32_0 : i32, i32
  }
  func.func @transform_4(%arg0: i32) -> (i32, i32) {
    %c0_i32 = arith.constant 0 : i32
    %c0_i32_0 = arith.constant 0 : i32
    return %arg0, %c0_i32 : i32, i32
  }
}

</mosaic_0001>

<llo_original>
// kernel: graphsage2_forward_padded.5
$region0: #{graphsage2_forward_padded.5}
  #allocation0 [shape = 'u32[]', space=smem, size = 0x4, offset = 0x4, fixed_abs, tag = 'smem constant byte address 0x4 - core index']
  #allocation1 [shape = 'u32[144,128]{1,0:T(1,128)}', space=vmem, size = 0x12000, scoped, tag = 'internal scratch']
  %s0 = inlined_call_operand.vmem [shape: bf16[128,128], index: 0, kind: input, shape index: {}]
  %s1 = inlined_call_operand.vmem [shape: bf16[128,256], index: 1, kind: input, shape index: {}, may-alias: {1,2}]
  %s2 = inlined_call_operand.vmem [shape: bf16[128,256], index: 2, kind: input, shape index: {}, may-alias: {1,2}]
  %s3 = inlined_call_operand.vmem [shape: f32[1,128], index: 3, kind: input, shape index: {}]
  %s4 = inlined_call_operand.vmem [shape: f32[128,128], index: 4, kind: output, shape index: {}]
  %s5 = sld [smem:[#allocation0]]
  $region108: #{graphsage2_forward_padded.5} parent=0
    _
  %s7 = ssub.s32 1, %s5
  %s8 = scalar_select 0, %s7, %s5
  $region1: #{graphsage2_forward_padded.5} parent=0
    #allocation2 [shape = 'u8[32768]{0}', space=vmem, size = 0x8000, scoped, tag = 'input window, operand 1, single buffered']
    #allocation3 [shape = 'u8[32768]{0}', space=vmem, size = 0x8000, scoped, tag = 'input window, operand 2, single buffered']
    // Predicated region
    $region2: #{graphsage2_forward_padded.5} parent=1 // pred_check
      _
    $region3: #{graphsage2_forward_padded.5} parent=1 // pred_check_branch
      %10 = sbr.rel (0) target = $region5
    $region4: #{graphsage2_forward_padded.5} parent=1 // pred_region
      _
    $region5: #{graphsage2_forward_padded.5} parent=1 // pred_fallthru
      _
    // Predicated region
    $region6: #{graphsage2_forward_padded.5} parent=1 // pred_check
      _
    $region7: #{graphsage2_forward_padded.5} parent=1 // pred_check_branch
      %12 = sbr.rel (0) target = $region9
    $region8: #{graphsage2_forward_padded.5} parent=1 // pred_region
      // Predicated region
      $region10: #{graphsage2_forward_padded.5} parent=8 // pred_check
        _
      $region11: #{graphsage2_forward_padded.5} parent=8 // pred_check_branch
        %14 = sbr.rel (0) target = $region13
      $region12: #{graphsage2_forward_padded.5} parent=8 // pred_region
        // Predicated region
        $region14: #{graphsage2_forward_padded.5} parent=12 // pred_check
          _
        $region15: #{graphsage2_forward_padded.5} parent=12 // pred_check_branch
          %16 = sbr.rel target = $region17
        $region16: #{graphsage2_forward_padded.5} parent=12 // pred_region
          // Predicated region
          $region29: #{graphsage2_forward_padded.5} parent=16 // pred_check
            _
          $region30: #{graphsage2_forward_padded.5} parent=16 // pred_check_branch
            %61 = sbr.rel (0) target = $region32
          $region31: #{graphsage2_forward_padded.5} parent=16 // pred_region
            loop: start=0, step=1, limit=1
            $region33: #{graphsage2_forward_padded.5} parent=31 // loop_pre_header
              _
            $region34: #{graphsage2_forward_padded.5} parent=31 // loop_header
              %s63 = sphi 0, %s67
              %p64 = scmp.ge.s32.totalorder %s63, 1
              %s68 = sphi %s1, %s1
              %s69 = sphi [#allocation2], [#allocation2]
            $region35: #{graphsage2_forward_padded.5} parent=31 // loop_header_branch
              %66 = sbr.rel (%p64) target = $region39
            $region36: #{graphsage2_forward_padded.5} parent=31 // loop_body
              _
            $region37: #{graphsage2_forward_padded.5} parent=31 // loop_footer
              %s67 = sadd.s32 1, %s63
            $region38: #{graphsage2_forward_padded.5} parent=31 // loop_footer_branch
              %62 = sbr.rel target = $region34
            $region39: #{graphsage2_forward_padded.5} parent=31 // loop_exit
              _
            loop: start=0, step=1, limit=1
            $region40: #{graphsage2_forward_padded.5} parent=31 // loop_pre_header
              _
            $region41: #{graphsage2_forward_padded.5} parent=31 // loop_header
              %s72 = sphi 0, %s76
              %p73 = scmp.ge.s32.totalorder %s72, 1
              %s77 = sphi %s1, %s1
              %s78 = sphi [#allocation2], [#allocation2]
            $region42: #{graphsage2_forward_padded.5} parent=31 // loop_header_branch
              %75 = sbr.rel (%p73) target = $region46
            $region43: #{graphsage2_forward_padded.5} parent=31 // loop_body
              %v79 = vld [vmem:[%s77] sm:$0xf]
              %80 = vst [vmem:[%s78] sm:$0xf] %v79
              %v81 = vld [vmem:[%s77 + $0x8] sm:$0xf]
              %82 = vst [vmem:[%s78 + $0x4] sm:$0xf] %v81
              %v83 = vld [vmem:[%s77 + $0x10] sm:$0xf]
              %84 = vst [vmem:[%s78 + $0x8] sm:$0xf] %v83
              %v85 = vld [vmem:[%s77 + $0x18] sm:$0xf]
              %86 = vst [vmem:[%s78 + $0xc] sm:$0xf] %v85
              %v87 = vld [vmem:[%s77 + $0x20] sm:$0xf]
              %88 = vst [vmem:[%s78 + $0x10] sm:$0xf] %v87
              %v89 = vld [vmem:[%s77 + $0x28] sm:$0xf]
              %90 = vst [vmem:[%s78 + $0x14] sm:$0xf] %v89
              %v91 = vld [vmem:[%s77 + $0x30] sm:$0xf]
              %92 = vst [vmem:[%s78 + $0x18] sm:$0xf] %v91
              %v93 = vld [vmem:[%s77 + $0x38] sm:$0xf]
              %94 = vst [vmem:[%s78 + $0x1c] sm:$0xf] %v93
              %v95 = vld [vmem:[%s77 + $0x40] sm:$0xf]
              %96 = vst [vmem:[%s78 + $0x20] sm:$0xf] %v95
              %v97 = vld [vmem:[%s77 + $0x48] sm:$0xf]
              %98 = vst [vmem:[%s78 + $0x24] sm:$0xf] %v97
              %v99 = vld [vmem:[%s77 + $0x50] sm:$0xf]
              %100 = vst [vmem:[%s78 + $0x28] sm:$0xf] %v99
              %v101 = vld [vmem:[%s77 + $0x58] sm:$0xf]
              %102 = vst [vmem:[%s78 + $0x2c] sm:$0xf] %v101
              %v103 = vld [vmem:[%s77 + $0x60] sm:$0xf]
              %104 = vst [vmem:[%s78 + $0x30] sm:$0xf] %v103
              %v105 = vld [vmem:[%s77 + $0x68] sm:$0xf]
              %106 = vst [vmem:[%s78 + $0x34] sm:$0xf] %v105
              %v107 = vld [vmem:[%s77 + $0x70] sm:$0xf]
              %108 = vst [vmem:[%s78 + $0x38] sm:$0xf] %v107
              %v109 = vld [vmem:[%s77 + $0x78] sm:$0xf]
              %110 = vst [vmem:[%s78 + $0x3c] sm:$0xf] %v109
            $region44: #{graphsage2_forward_padded.5} parent=31 // loop_footer
              %s76 = sadd.s32 1, %s72
            $region45: #{graphsage2_forward_padded.5} parent=31 // loop_footer_branch
              %71 = sbr.rel target = $region41
            $region46: #{graphsage2_forward_padded.5} parent=31 // loop_exit
              _
          $region32: #{graphsage2_forward_padded.5} parent=16 // pred_fallthru
            _
        $region17: #{graphsage2_forward_padded.5} parent=12 // pred_fallthru
          _
        // Predicated region
        $region18: #{graphsage2_forward_padded.5} parent=12 // pred_check
          _
        $region19: #{graphsage2_forward_padded.5} parent=12 // pred_check_branch
          %18 = sbr.rel (0) target = $region21
        $region20: #{graphsage2_forward_padded.5} parent=12 // pred_region
          loop: start=0, step=1, limit=1
          $region22: #{graphsage2_forward_padded.5} parent=20 // loop_pre_header
            _
          $region23: #{graphsage2_forward_padded.5} parent=20 // loop_header
            %s21 = sphi 0, %s25
            %p22 = scmp.ge.s32.totalorder %s21, 1
            %s26 = sphi %s1, %s1
            %s27 = sphi [#allocation2], [#allocation2]
          $region24: #{graphsage2_forward_padded.5} parent=20 // loop_header_branch
            %24 = sbr.rel (%p22) target = $region28
          $region25: #{graphsage2_forward_padded.5} parent=20 // loop_body
            %v28 = vld [vmem:[%s26] sm:$0xf]
            %29 = vst [vmem:[%s27] sm:$0xf] %v28
            %v30 = vld [vmem:[%s26 + $0x8] sm:$0xf]
            %31 = vst [vmem:[%s27 + $0x4] sm:$0xf] %v30
            %v32 = vld [vmem:[%s26 + $0x10] sm:$0xf]
            %33 = vst [vmem:[%s27 + $0x8] sm:$0xf] %v32
            %v34 = vld [vmem:[%s26 + $0x18] sm:$0xf]
            %35 = vst [vmem:[%s27 + $0xc] sm:$0xf] %v34
            %v36 = vld [vmem:[%s26 + $0x20] sm:$0xf]
            %37 = vst [vmem:[%s27 + $0x10] sm:$0xf] %v36
            %v38 = vld [vmem:[%s26 + $0x28] sm:$0xf]
            %39 = vst [vmem:[%s27 + $0x14] sm:$0xf] %v38
            %v40 = vld [vmem:[%s26 + $0x30] sm:$0xf]
            %41 = vst [vmem:[%s27 + $0x18] sm:$0xf] %v40
            %v42 = vld [vmem:[%s26 + $0x38] sm:$0xf]
            %43 = vst [vmem:[%s27 + $0x1c] sm:$0xf] %v42
            %v44 = vld [vmem:[%s26 + $0x40] sm:$0xf]
            %45 = vst [vmem:[%s27 + $0x20] sm:$0xf] %v44
            %v46 = vld [vmem:[%s26 + $0x48] sm:$0xf]
            %47 = vst [vmem:[%s27 + $0x24] sm:$0xf] %v46
            %v48 = vld [vmem:[%s26 + $0x50] sm:$0xf]
            %49 = vst [vmem:[%s27 + $0x28] sm:$0xf] %v48
            %v50 = vld [vmem:[%s26 + $0x58] sm:$0xf]
            %51 = vst [vmem:[%s27 + $0x2c] sm:$0xf] %v50
            %v52 = vld [vmem:[%s26 + $0x60] sm:$0xf]
            %53 = vst [vmem:[%s27 + $0x30] sm:$0xf] %v52
            %v54 = vld [vmem:[%s26 + $0x68] sm:$0xf]
            %55 = vst [vmem:[%s27 + $0x34] sm:$0xf] %v54
            %v56 = vld [vmem:[%s26 + $0x70] sm:$0xf]
            %57 = vst [vmem:[%s27 + $0x38] sm:$0xf] %v56
            %v58 = vld [vmem:[%s26 + $0x78] sm:$0xf]
            %59 = vst [vmem:[%s27 + $0x3c] sm:$0xf] %v58
          $region26: #{graphsage2_forward_padded.5} parent=20 // loop_footer
            %s25 = sadd.s32 1, %s21
          $region27: #{graphsage2_forward_padded.5} parent=20 // loop_footer_branch
            %20 = sbr.rel target = $region23
          $region28: #{graphsage2_forward_padded.5} parent=20 // loop_exit
            _
        $region21: #{graphsage2_forward_padded.5} parent=12 // pred_fallthru
          _
      $region13: #{graphsage2_forward_padded.5} parent=8 // pred_fallthru
        _
      %111 = vnop
    $region9: #{graphsage2_forward_padded.5} parent=1 // pred_fallthru
      _
    // Predicated region
    $region47: #{graphsage2_forward_padded.5} parent=1 // pred_check
      _
    $region48: #{graphsage2_forward_padded.5} parent=1 // pred_check_branch
      %113 = sbr.rel (0) target = $region50
    $region49: #{graphsage2_forward_padded.5} parent=1 // pred_region
      %s114 = scalar_lea.vmem %s2, 4
      // Predicated region
      $region51: #{graphsage2_forward_padded.5} parent=49 // pred_check
        _
      $region52: #{graphsage2_forward_padded.5} parent=49 // pred_check_branch
        %116 = sbr.rel (0) target = $region54
      $region53: #{graphsage2_forward_padded.5} parent=49 // pred_region
        // Predicated region
        $region55: #{graphsage2_forward_padded.5} parent=53 // pred_check
          _
        $region56: #{graphsage2_forward_padded.5} parent=53 // pred_check_branch
          %118 = sbr.rel target = $region58
        $region57: #{graphsage2_forward_padded.5} parent=53 // pred_region
          // Predicated region
          $region70: #{graphsage2_forward_padded.5} parent=57 // pred_check
            _
          $region71: #{graphsage2_forward_padded.5} parent=57 // pred_check_branch
            %163 = sbr.rel (0) target = $region73
          $region72: #{graphsage2_forward_padded.5} parent=57 // pred_region
            loop: start=0, step=1, limit=1
            $region74: #{graphsage2_forward_padded.5} parent=72 // loop_pre_header
              _
            $region75: #{graphsage2_forward_padded.5} parent=72 // loop_header
              %s165 = sphi 0, %s169
              %p166 = scmp.ge.s32.totalorder %s165, 1
              %s170 = sphi %s114, %s114
              %s171 = sphi [#allocation3], [#allocation3]
            $region76: #{graphsage2_forward_padded.5} parent=72 // loop_header_branch
              %168 = sbr.rel (%p166) target = $region80
            $region77: #{graphsage2_forward_padded.5} parent=72 // loop_body
              _
            $region78: #{graphsage2_forward_padded.5} parent=72 // loop_footer
              %s169 = sadd.s32 1, %s165
            $region79: #{graphsage2_forward_padded.5} parent=72 // loop_footer_branch
              %164 = sbr.rel target = $region75
            $region80: #{graphsage2_forward_padded.5} parent=72 // loop_exit
              _
            loop: start=0, step=1, limit=1
            $region81: #{graphsage2_forward_padded.5} parent=72 // loop_pre_header
              _
            $region82: #{graphsage2_forward_padded.5} parent=72 // loop_header
              %s174 = sphi 0, %s178
              %p175 = scmp.ge.s32.totalorder %s174, 1
              %s179 = sphi %s114, %s114
              %s180 = sphi [#allocation3], [#allocation3]
            $region83: #{graphsage2_forward_padded.5} parent=72 // loop_header_branch
              %177 = sbr.rel (%p175) target = $region87
            $region84: #{graphsage2_forward_padded.5} parent=72 // loop_body
              %v181 = vld [vmem:[%s179] sm:$0xf]
              %182 = vst [vmem:[%s180] sm:$0xf] %v181
              %v183 = vld [vmem:[%s179 + $0x8] sm:$0xf]
              %184 = vst [vmem:[%s180 + $0x4] sm:$0xf] %v183
              %v185 = vld [vmem:[%s179 + $0x10] sm:$0xf]
              %186 = vst [vmem:[%s180 + $0x8] sm:$0xf] %v185
              %v187 = vld [vmem:[%s179 + $0x18] sm:$0xf]
              %188 = vst [vmem:[%s180 + $0xc] sm:$0xf] %v187
              %v189 = vld [vmem:[%s179 + $0x20] sm:$0xf]
              %190 = vst [vmem:[%s180 + $0x10] sm:$0xf] %v189
              %v191 = vld [vmem:[%s179 + $0x28] sm:$0xf]
              %192 = vst [vmem:[%s180 + $0x14] sm:$0xf] %v191
              %v193 = vld [vmem:[%s179 + $0x30] sm:$0xf]
              %194 = vst [vmem:[%s180 + $0x18] sm:$0xf] %v193
              %v195 = vld [vmem:[%s179 + $0x38] sm:$0xf]
              %196 = vst [vmem:[%s180 + $0x1c] sm:$0xf] %v195
              %v197 = vld [vmem:[%s179 + $0x40] sm:$0xf]
              %198 = vst [vmem:[%s180 + $0x20] sm:$0xf] %v197
              %v199 = vld [vmem:[%s179 + $0x48] sm:$0xf]
              %200 = vst [vmem:[%s180 + $0x24] sm:$0xf] %v199
              %v201 = vld [vmem:[%s179 + $0x50] sm:$0xf]
              %202 = vst [vmem:[%s180 + $0x28] sm:$0xf] %v201
              %v203 = vld [vmem:[%s179 + $0x58] sm:$0xf]
              %204 = vst [vmem:[%s180 + $0x2c] sm:$0xf] %v203
              %v205 = vld [vmem:[%s179 + $0x60] sm:$0xf]
              %206 = vst [vmem:[%s180 + $0x30] sm:$0xf] %v205
              %v207 = vld [vmem:[%s179 + $0x68] sm:$0xf]
              %208 = vst [vmem:[%s180 + $0x34] sm:$0xf] %v207
              %v209 = vld [vmem:[%s179 + $0x70] sm:$0xf]
              %210 = vst [vmem:[%s180 + $0x38] sm:$0xf] %v209
              %v211 = vld [vmem:[%s179 + $0x78] sm:$0xf]
              %212 = vst [vmem:[%s180 + $0x3c] sm:$0xf] %v211
            $region85: #{graphsage2_forward_padded.5} parent=72 // loop_footer
              %s178 = sadd.s32 1, %s174
            $region86: #{graphsage2_forward_padded.5} parent=72 // loop_footer_branch
              %173 = sbr.rel target = $region82
            $region87: #{graphsage2_forward_padded.5} parent=72 // loop_exit
              _
          $region73: #{graphsage2_forward_padded.5} parent=57 // pred_fallthru
            _
        $region58: #{graphsage2_forward_padded.5} parent=53 // pred_fallthru
          _
        // Predicated region
        $region59: #{graphsage2_forward_padded.5} parent=53 // pred_check
          _
        $region60: #{graphsage2_forward_padded.5} parent=53 // pred_check_branch
          %120 = sbr.rel (0) target = $region62
        $region61: #{graphsage2_forward_padded.5} parent=53 // pred_region
          loop: start=0, step=1, limit=1
          $region63: #{graphsage2_forward_padded.5} parent=61 // loop_pre_header
            _
          $region64: #{graphsage2_forward_padded.5} parent=61 // loop_header
            %s123 = sphi 0, %s127
            %p124 = scmp.ge.s32.totalorder %s123, 1
            %s128 = sphi %s114, %s114
            %s129 = sphi [#allocation3], [#allocation3]
          $region65: #{graphsage2_forward_padded.5} parent=61 // loop_header_branch
            %126 = sbr.rel (%p124) target = $region69
          $region66: #{graphsage2_forward_padded.5} parent=61 // loop_body
            %v130 = vld [vmem:[%s128] sm:$0xf]
            %131 = vst [vmem:[%s129] sm:$0xf] %v130
            %v132 = vld [vmem:[%s128 + $0x8] sm:$0xf]
            %133 = vst [vmem:[%s129 + $0x4] sm:$0xf] %v132
            %v134 = vld [vmem:[%s128 + $0x10] sm:$0xf]
            %135 = vst [vmem:[%s129 + $0x8] sm:$0xf] %v134
            %v136 = vld [vmem:[%s128 + $0x18] sm:$0xf]
            %137 = vst [vmem:[%s129 + $0xc] sm:$0xf] %v136
            %v138 = vld [vmem:[%s128 + $0x20] sm:$0xf]
            %139 = vst [vmem:[%s129 + $0x10] sm:$0xf] %v138
            %v140 = vld [vmem:[%s128 + $0x28] sm:$0xf]
            %141 = vst [vmem:[%s129 + $0x14] sm:$0xf] %v140
            %v142 = vld [vmem:[%s128 + $0x30] sm:$0xf]
            %143 = vst [vmem:[%s129 + $0x18] sm:$0xf] %v142
            %v144 = vld [vmem:[%s128 + $0x38] sm:$0xf]
            %145 = vst [vmem:[%s129 + $0x1c] sm:$0xf] %v144
            %v146 = vld [vmem:[%s128 + $0x40] sm:$0xf]
            %147 = vst [vmem:[%s129 + $0x20] sm:$0xf] %v146
            %v148 = vld [vmem:[%s128 + $0x48] sm:$0xf]
            %149 = vst [vmem:[%s129 + $0x24] sm:$0xf] %v148
            %v150 = vld [vmem:[%s128 + $0x50] sm:$0xf]
            %151 = vst [vmem:[%s129 + $0x28] sm:$0xf] %v150
            %v152 = vld [vmem:[%s128 + $0x58] sm:$0xf]
            %153 = vst [vmem:[%s129 + $0x2c] sm:$0xf] %v152
            %v154 = vld [vmem:[%s128 + $0x60] sm:$0xf]
            %155 = vst [vmem:[%s129 + $0x30] sm:$0xf] %v154
            %v156 = vld [vmem:[%s128 + $0x68] sm:$0xf]
            %157 = vst [vmem:[%s129 + $0x34] sm:$0xf] %v156
            %v158 = vld [vmem:[%s128 + $0x70] sm:$0xf]
            %159 = vst [vmem:[%s129 + $0x38] sm:$0xf] %v158
            %v160 = vld [vmem:[%s128 + $0x78] sm:$0xf]
            %161 = vst [vmem:[%s129 + $0x3c] sm:$0xf] %v160
          $region67: #{graphsage2_forward_padded.5} parent=61 // loop_footer
            %s127 = sadd.s32 1, %s123
          $region68: #{graphsage2_forward_padded.5} parent=61 // loop_footer_branch
            %122 = sbr.rel target = $region64
          $region69: #{graphsage2_forward_padded.5} parent=61 // loop_exit
            _
        $region62: #{graphsage2_forward_padded.5} parent=53 // pred_fallthru
          _
      $region54: #{graphsage2_forward_padded.5} parent=49 // pred_fallthru
        _
      %213 = vnop
    $region50: #{graphsage2_forward_padded.5} parent=1 // pred_fallthru
      _
    // Predicated region
    $region88: #{graphsage2_forward_padded.5} parent=1 // pred_check
      _
    $region89: #{graphsage2_forward_padded.5} parent=1 // pred_check_branch
      %215 = sbr.rel (0) target = $region91
    $region90: #{graphsage2_forward_padded.5} parent=1 // pred_region
      _
    $region91: #{graphsage2_forward_padded.5} parent=1 // pred_fallthru
      _
    // Predicated region
    $region92: #{graphsage2_forward_padded.5} parent=1 // pred_check
      _
    $region93: #{graphsage2_forward_padded.5} parent=1 // pred_check_branch
      %217 = sbr.rel (0) target = $region95
    $region94: #{graphsage2_forward_padded.5} parent=1 // pred_region
      _
    $region95: #{graphsage2_forward_padded.5} parent=1 // pred_fallthru
      _
    // Predicated region
    $region96: #{graphsage2_forward_padded.5} parent=1 // pred_check
      _
    $region97: #{graphsage2_forward_padded.5} parent=1 // pred_check_branch
      %219 = sbr.rel (0) target = $region99
    $region98: #{graphsage2_forward_padded.5} parent=1 // pred_region
      _
    $region99: #{graphsage2_forward_padded.5} parent=1 // pred_fallthru
      _
    %v221 = vld [vmem:[%s0] sm:$0xf]
    %v222 = vld [vmem:[%s0 + $0x4] sm:$0xf]
    %v223 = vld [vmem:[%s0 + $0x8] sm:$0xf]
    %v224 = vld [vmem:[%s0 + $0xc] sm:$0xf]
    %v225 = vld [vmem:[%s0 + $0x10] sm:$0xf]
    %v226 = vld [vmem:[%s0 + $0x14] sm:$0xf]
    %v227 = vld [vmem:[%s0 + $0x18] sm:$0xf]
    %v228 = vld [vmem:[%s0 + $0x1c] sm:$0xf]
    %v229 = vld [vmem:[%s0 + $0x20] sm:$0xf]
    %v230 = vld [vmem:[%s0 + $0x24] sm:$0xf]
    %v231 = vld [vmem:[%s0 + $0x28] sm:$0xf]
    %v232 = vld [vmem:[%s0 + $0x2c] sm:$0xf]
    %v233 = vld [vmem:[%s0 + $0x30] sm:$0xf]
    %v234 = vld [vmem:[%s0 + $0x34] sm:$0xf]
    %v235 = vld [vmem:[%s0 + $0x38] sm:$0xf]
    %v236 = vld [vmem:[%s0 + $0x3c] sm:$0xf]
    %v237 = vunpack.c.l.bf16 %v221
    %v238 = vunpack.c.l.bf16 %v222
    %v239 = vunpack.c.l.bf16 %v223
    %v240 = vunpack.c.l.bf16 %v224
    %v241 = vunpack.c.l.bf16 %v225
    %v242 = vunpack.c.l.bf16 %v226
    %v243 = vunpack.c.l.bf16 %v227
    %v244 = vunpack.c.l.bf16 %v228
    %v245 = vunpack.c.l.bf16 %v229
    %v246 = vunpack.c.l.bf16 %v230
    %v247 = vunpack.c.l.bf16 %v231
    %v248 = vunpack.c.l.bf16 %v232
    %v249 = vunpack.c.l.bf16 %v233
    %v250 = vunpack.c.l.bf16 %v234
    %v251 = vunpack.c.l.bf16 %v235
    %v252 = vunpack.c.l.bf16 %v236
    %253 = vadd.xlane.f32.xlu0 %v237
    %v254 = vpop.xlane.xlu0 %253
    %255 = vadd.xlane.f32.xlu0 %v238
    %v256 = vpop.xlane.xlu0 %255
    %257 = vadd.xlane.f32.xlu0 %v239
    %v258 = vpop.xlane.xlu0 %257
    %259 = vadd.xlane.f32.xlu0 %v240
    %v260 = vpop.xlane.xlu0 %259
    %261 = vadd.xlane.f32.xlu0 %v241
    %v262 = vpop.xlane.xlu0 %261
    %263 = vadd.xlane.f32.xlu0 %v242
    %v264 = vpop.xlane.xlu0 %263
    %265 = vadd.xlane.f32.xlu0 %v243
    %v266 = vpop.xlane.xlu0 %265
    %267 = vadd.xlane.f32.xlu0 %v244
    %v268 = vpop.xlane.xlu0 %267
    %269 = vadd.xlane.f32.xlu0 %v245
    %v270 = vpop.xlane.xlu0 %269
    %271 = vadd.xlane.f32.xlu0 %v246
    %v272 = vpop.xlane.xlu0 %271
    %273 = vadd.xlane.f32.xlu0 %v247
    %v274 = vpop.xlane.xlu0 %273
    %275 = vadd.xlane.f32.xlu0 %v248
    %v276 = vpop.xlane.xlu0 %275
    %277 = vadd.xlane.f32.xlu0 %v249
    %v278 = vpop.xlane.xlu0 %277
    %279 = vadd.xlane.f32.xlu0 %v250
    %v280 = vpop.xlane.xlu0 %279
    %281 = vadd.xlane.f32.xlu0 %v251
    %v282 = vpop.xlane.xlu0 %281
    %283 = vadd.xlane.f32.xlu0 %v252
    %v284 = vpop.xlane.xlu0 %283
    %v285 = vmax.f32 %v254, 1.0
    %v286 = vmax.f32 %v256, 1.0
    %v287 = vmax.f32 %v258, 1.0
    %v288 = vmax.f32 %v260, 1.0
    %v289 = vmax.f32 %v262, 1.0
    %v290 = vmax.f32 %v264, 1.0
    %v291 = vmax.f32 %v266, 1.0
    %v292 = vmax.f32 %v268, 1.0
    %v293 = vmax.f32 %v270, 1.0
    %v294 = vmax.f32 %v272, 1.0
    %v295 = vmax.f32 %v274, 1.0
    %v296 = vmax.f32 %v276, 1.0
    %v297 = vmax.f32 %v278, 1.0
    %v298 = vmax.f32 %v280, 1.0
    %v299 = vmax.f32 %v282, 1.0
    %v300 = vmax.f32 %v284, 1.0
    %v301 = vrcp.pop %v285
    %v302 = vmul.f32 1.0, %v301
    %v303 = vrcp.pop %v286
    %v304 = vmul.f32 1.0, %v303
    %v305 = vrcp.pop %v287
    %v306 = vmul.f32 1.0, %v305
    %v307 = vrcp.pop %v288
    %v308 = vmul.f32 1.0, %v307
    %v309 = vrcp.pop %v289
    %v310 = vmul.f32 1.0, %v309
    %v311 = vrcp.pop %v290
    %v312 = vmul.f32 1.0, %v311
    %v313 = vrcp.pop %v291
    %v314 = vmul.f32 1.0, %v313
    %v315 = vrcp.pop %v292
    %v316 = vmul.f32 1.0, %v315
    %v317 = vrcp.pop %v293
    %v318 = vmul.f32 1.0, %v317
    %v319 = vrcp.pop %v294
    %v320 = vmul.f32 1.0, %v319
    %v321 = vrcp.pop %v295
    %v322 = vmul.f32 1.0, %v321
    %v323 = vrcp.pop %v296
    %v324 = vmul.f32 1.0, %v323
    %v325 = vrcp.pop %v297
    %v326 = vmul.f32 1.0, %v325
    %v327 = vrcp.pop %v298
    %v328 = vmul.f32 1.0, %v327
    %v329 = vrcp.pop %v299
    %v330 = vmul.f32 1.0, %v329
    %v331 = vrcp.pop %v300
    %v332 = vmul.f32 1.0, %v331
    %v333 = vld [vmem:[#allocation2] sm:$0xf]
    %v334 = vld [vmem:[#allocation2 + $0x4] sm:$0xf]
    %v335 = vld [vmem:[#allocation2 + $0x8] sm:$0xf]
    %v336 = vld [vmem:[#allocation2 + $0xc] sm:$0xf]
    %v337 = vld [vmem:[#allocation2 + $0x10] sm:$0xf]
    %v338 = vld [vmem:[#allocation2 + $0x14] sm:$0xf]
    %v339 = vld [vmem:[#allocation2 + $0x18] sm:$0xf]
    %v340 = vld [vmem:[#allocation2 + $0x1c] sm:$0xf]
    %v341 = vld [vmem:[#allocation2 + $0x20] sm:$0xf]
    %v342 = vld [vmem:[#allocation2 + $0x24] sm:$0xf]
    %v343 = vld [vmem:[#allocation2 + $0x28] sm:$0xf]
    %v344 = vld [vmem:[#allocation2 + $0x2c] sm:$0xf]
    %v345 = vld [vmem:[#allocation2 + $0x30] sm:$0xf]
    %v346 = vld [vmem:[#allocation2 + $0x34] sm:$0xf]
    %v347 = vld [vmem:[#allocation2 + $0x38] sm:$0xf]
    %v348 = vld [vmem:[#allocation2 + $0x3c] sm:$0xf]
    %v365 = vunpack.c.l.b16 %v221
    %v366 = vunpack.c.l.b16 %v222
    %v367 = vunpack.c.l.b16 %v223
    %v368 = vunpack.c.l.b16 %v224
    %v369 = vunpack.c.l.b16 %v225
    %v370 = vunpack.c.l.b16 %v226
    %v371 = vunpack.c.l.b16 %v227
    %v372 = vunpack.c.l.b16 %v228
    %v373 = vunpack.c.l.b16 %v229
    %v374 = vunpack.c.l.b16 %v230
    %v375 = vunpack.c.l.b16 %v231
    %v376 = vunpack.c.l.b16 %v232
    %v377 = vunpack.c.l.b16 %v233
    %v378 = vunpack.c.l.b16 %v234
    %v379 = vunpack.c.l.b16 %v235
    %v380 = vunpack.c.l.b16 %v236
    %v381 = vpack.c.b16 %v366, %v365
    %v382 = vpack.c.b16 %v368, %v367
    %v383 = vpack.c.b16 %v370, %v369
    %v384 = vpack.c.b16 %v372, %v371
    %v385 = vpack.c.b16 %v374, %v373
    %v386 = vpack.c.b16 %v376, %v375
    %v387 = vpack.c.b16 %v378, %v377
    %v388 = vpack.c.b16 %v380, %v379
    %v413 = vunpack.c.l.b16 %v333
    %v414 = vunpack.c.l.b16 %v334
    %v415 = vunpack.c.l.b16 %v335
    %v416 = vunpack.c.l.b16 %v336
    %v417 = vunpack.c.l.b16 %v337
    %v418 = vunpack.c.l.b16 %v338
    %v419 = vunpack.c.l.b16 %v339
    %v420 = vunpack.c.l.b16 %v340
    %v421 = vunpack.c.l.b16 %v341
    %v422 = vunpack.c.l.b16 %v342
    %v423 = vunpack.c.l.b16 %v343
    %v424 = vunpack.c.l.b16 %v344
    %v425 = vunpack.c.l.b16 %v345
    %v426 = vunpack.c.l.b16 %v346
    %v427 = vunpack.c.l.b16 %v347
    %v428 = vunpack.c.l.b16 %v348
    %v429 = vpack.c.b16 %v414, %v413
    %v430 = vpack.c.b16 %v416, %v415
    %v431 = vpack.c.b16 %v418, %v417
    %v432 = vpack.c.b16 %v420, %v419
    %v433 = vpack.c.b16 %v422, %v421
    %v434 = vpack.c.b16 %v424, %v423
    %v435 = vpack.c.b16 %v426, %v425
    %v436 = vpack.c.b16 %v428, %v427
    %445 = vmatprep.subr.bf16.mxu0 0
    %446 = vmatpush1.bf16.msra.mxu0 %v429
    %447 = vmatprep.subr.bf16.mxu0 0
    %448 = vmatpush1.bf16.msra.mxu0 %v430
    %449 = vmatprep.subr.bf16.mxu0 0
    %450 = vmatpush1.bf16.msra.mxu0 %v431
    %451 = vmatprep.subr.bf16.mxu0 0
    %452 = vmatpush1.bf16.msra.mxu0 %v432
    %453 = vmatprep.subr.bf16.mxu0 0
    %454 = vmatpush1.bf16.msra.mxu0 %v433
    %455 = vmatprep.subr.bf16.mxu0 0
    %456 = vmatpush1.bf16.msra.mxu0 %v434
    %457 = vmatprep.subr.bf16.mxu0 0
    %458 = vmatpush1.bf16.msra.mxu0 %v435
    %459 = vmatprep.subr.bf16.mxu0 0
    %460 = vmatpush1.bf16.msra.mxu0 %v436
    %461 = vmatprep.subr.bf16.mxu0 0
    %462 = vmatpush1.bf16.msra.mxu0 0
    %463 = vmatprep.subr.bf16.mxu0 0
    %464 = vmatpush1.bf16.msra.mxu0 0
    %465 = vmatprep.subr.bf16.mxu0 0
    %466 = vmatpush1.bf16.msra.mxu0 0
    %467 = vmatprep.subr.bf16.mxu0 0
    %468 = vmatpush1.bf16.msra.mxu0 0
    %469 = vmatprep.subr.bf16.mxu0 0
    %470 = vmatpush1.bf16.msra.mxu0 0
    %471 = vmatprep.subr.bf16.mxu0 0
    %472 = vmatpush1.bf16.msra.mxu0 0
    %473 = vmatprep.subr.bf16.mxu0 0
    %474 = vmatpush1.bf16.msra.mxu0 0
    %475 = vmatprep.subr.bf16.mxu0 0
    %476 = vmatpush1.bf16.msra.mxu0 0
    %477 = vmatprep.mubr.bf16.mxu0 0
    %478 = vmatmul.mubr.bf16.gmra.mrb[0].mxu0 %v381
    %v479 = vpop.f32.mrb[0].mxu0
    %v480 = vadd.f32 0.0, %v479
    %v481 = vpop.f32.mrb[0].mxu0
    %v482 = vpop.f32.mrb[0].mxu0
    %v483 = vadd.f32 0.0, %v482
    %v484 = vpop.f32.mrb[0].mxu0
    %485 = vmatprep.mubr.bf16.mxu0 0
    %486 = vmatmul.mubr.bf16.gmra.mrb[0].mxu0 %v382
    %v487 = vpop.f32.mrb[0].mxu0
    %v488 = vadd.f32 0.0, %v487
    %v489 = vpop.f32.mrb[0].mxu0
    %v490 = vpop.f32.mrb[0].mxu0
    %v491 = vadd.f32 0.0, %v490
    %v492 = vpop.f32.mrb[0].mxu0
    %493 = vmatprep.mubr.bf16.mxu0 0
    %494 = vmatmul.mubr.bf16.gmra.mrb[0].mxu0 %v383
    %v495 = vpop.f32.mrb[0].mxu0
    %v496 = vadd.f32 0.0, %v495
    %v497 = vpop.f32.mrb[0].mxu0
    %v498 = vpop.f32.mrb[0].mxu0
    %v499 = vadd.f32 0.0, %v498
    %v500 = vpop.f32.mrb[0].mxu0
    %501 = vmatprep.mubr.bf16.mxu0 0
    %502 = vmatmul.mubr.bf16.gmra.mrb[0].mxu0 %v384
    %v503 = vpop.f32.mrb[0].mxu0
    %v504 = vadd.f32 0.0, %v503
    %v505 = vpop.f32.mrb[0].mxu0
    %v506 = vpop.f32.mrb[0].mxu0
    %v507 = vadd.f32 0.0, %v506
    %v508 = vpop.f32.mrb[0].mxu0
    %509 = vmatprep.mubr.bf16.mxu0 0
    %510 = vmatmul.mubr.bf16.gmra.mrb[0].mxu0 %v385
    %v511 = vpop.f32.mrb[0].mxu0
    %v512 = vadd.f32 0.0, %v511
    %v513 = vpop.f32.mrb[0].mxu0
    %v514 = vpop.f32.mrb[0].mxu0
    %v515 = vadd.f32 0.0, %v514
    %v516 = vpop.f32.mrb[0].mxu0
    %517 = vmatprep.mubr.bf16.mxu0 0
    %518 = vmatmul.mubr.bf16.gmra.mrb[0].mxu0 %v386
    %v519 = vpop.f32.mrb[0].mxu0
    %v520 = vadd.f32 0.0, %v519
    %v521 = vpop.f32.mrb[0].mxu0
    %v522 = vpop.f32.mrb[0].mxu0
    %v523 = vadd.f32 0.0, %v522
    %v524 = vpop.f32.mrb[0].mxu0
    %525 = vmatprep.mubr.bf16.mxu0 0
    %526 = vmatmul.mubr.bf16.gmra.mrb[0].mxu0 %v387
    %v527 = vpop.f32.mrb[0].mxu0
    %v528 = vadd.f32 0.0, %v527
    %v529 = vpop.f32.mrb[0].mxu0
    %v530 = vpop.f32.mrb[0].mxu0
    %v531 = vadd.f32 0.0, %v530
    %v532 = vpop.f32.mrb[0].mxu0
    %533 = vmatprep.mubr.bf16.mxu0 0
    %534 = vmatmul.mubr.bf16.gmra.mrb[0].mxu0 %v388
    %v535 = vpop.f32.mrb[0].mxu0
    %v536 = vadd.f32 0.0, %v535
    %v537 = vpop.f32.mrb[0].mxu0
    %v538 = vpop.f32.mrb[0].mxu0
    %v539 = vadd.f32 0.0, %v538
    %v540 = vpop.f32.mrb[0].mxu0
    %541 = vdwg.mxu0
    %v542 = vmul.f32 %v480, %v302
    %v543 = vmul.f32 %v483, %v304
    %v544 = vmul.f32 %v488, %v306
    %v545 = vmul.f32 %v491, %v308
    %v546 = vmul.f32 %v496, %v310
    %v547 = vmul.f32 %v499, %v312
    %v548 = vmul.f32 %v504, %v314
    %v549 = vmul.f32 %v507, %v316
    %v550 = vmul.f32 %v512, %v318
    %v551 = vmul.f32 %v515, %v320
    %v552 = vmul.f32 %v520, %v322
    %v553 = vmul.f32 %v523, %v324
    %v554 = vmul.f32 %v528, %v326
    %v555 = vmul.f32 %v531, %v328
    %v556 = vmul.f32 %v536, %v330
    %v557 = vmul.f32 %v539, %v332
    %v558 = vld [vmem:[#allocation3] sm:$0xf]
    %v559 = vld [vmem:[#allocation3 + $0x4] sm:$0xf]
    %v560 = vld [vmem:[#allocation3 + $0x8] sm:$0xf]
    %v561 = vld [vmem:[#allocation3 + $0xc] sm:$0xf]
    %v562 = vld [vmem:[#allocation3 + $0x10] sm:$0xf]
    %v563 = vld [vmem:[#allocation3 + $0x14] sm:$0xf]
    %v564 = vld [vmem:[#allocation3 + $0x18] sm:$0xf]
    %v565 = vld [vmem:[#allocation3 + $0x1c] sm:$0xf]
    %v566 = vld [vmem:[#allocation3 + $0x20] sm:$0xf]
    %v567 = vld [vmem:[#allocation3 + $0x24] sm:$0xf]
    %v568 = vld [vmem:[#allocation3 + $0x28] sm:$0xf]
    %v569 = vld [vmem:[#allocation3 + $0x2c] sm:$0xf]
    %v570 = vld [vmem:[#allocation3 + $0x30] sm:$0xf]
    %v571 = vld [vmem:[#allocation3 + $0x34] sm:$0xf]
    %v572 = vld [vmem:[#allocation3 + $0x38] sm:$0xf]
    %v573 = vld [vmem:[#allocation3 + $0x3c] sm:$0xf]
    %v574 = vunpack.c.l.bf16 %v558
    %v575 = vunpack.c.l.bf16 %v559
    %v576 = vunpack.c.l.bf16 %v560
    %v577 = vunpack.c.l.bf16 %v561
    %v578 = vunpack.c.l.bf16 %v562
    %v579 = vunpack.c.l.bf16 %v563
    %v580 = vunpack.c.l.bf16 %v564
    %v581 = vunpack.c.l.bf16 %v565
    %v582 = vunpack.c.l.bf16 %v566
    %v583 = vunpack.c.l.bf16 %v567
    %v584 = vunpack.c.l.bf16 %v568
    %v585 = vunpack.c.l.bf16 %v569
    %v586 = vunpack.c.l.bf16 %v570
    %v587 = vunpack.c.l.bf16 %v571
    %v588 = vunpack.c.l.bf16 %v572
    %v589 = vunpack.c.l.bf16 %v573
    %v590 = vadd.f32 %v542, %v574
    %v591 = vadd.f32 %v543, %v575
    %v592 = vadd.f32 %v544, %v576
    %v593 = vadd.f32 %v545, %v577
    %v594 = vadd.f32 %v546, %v578
    %v595 = vadd.f32 %v547, %v579
    %v596 = vadd.f32 %v548, %v580
    %v597 = vadd.f32 %v549, %v581
    %v598 = vadd.f32 %v550, %v582
    %v599 = vadd.f32 %v551, %v583
    %v600 = vadd.f32 %v552, %v584
    %v601 = vadd.f32 %v553, %v585
    %v602 = vadd.f32 %v554, %v586
    %v603 = vadd.f32 %v555, %v587
    %v604 = vadd.f32 %v556, %v588
    %v605 = vadd.f32 %v557, %v589
    %v606 = vld [vmem:[%s3] sm:$0x1]
    %v608 = vlaneseq
    %v609 = vshrl.u32 %v608, 7
    %v610 = vsub.s32 0, %v609
    %v611 = vrot.slane %v606, %v610
    %v613 = vadd.f32 %v590, %v611
    %v614 = vadd.f32 %v591, %v611
    %v615 = vadd.f32 %v592, %v611
    %v616 = vadd.f32 %v593, %v611
    %v617 = vadd.f32 %v594, %v611
    %v618 = vadd.f32 %v595, %v611
    %v619 = vadd.f32 %v596, %v611
    %v620 = vadd.f32 %v597, %v611
    %v621 = vadd.f32 %v598, %v611
    %v622 = vadd.f32 %v599, %v611
    %v623 = vadd.f32 %v600, %v611
    %v624 = vadd.f32 %v601, %v611
    %v625 = vadd.f32 %v602, %v611
    %v626 = vadd.f32 %v603, %v611
    %v627 = vadd.f32 %v604, %v611
    %v628 = vadd.f32 %v605, %v611
    %629 = vst [vmem:[%s4] sm:$0xff] %v613
    %630 = vst [vmem:[%s4 + $0x8] sm:$0xff] %v614
    %631 = vst [vmem:[%s4 + $0x10] sm:$0xff] %v615
    %632 = vst [vmem:[%s4 + $0x18] sm:$0xff] %v616
    %633 = vst [vmem:[%s4 + $0x20] sm:$0xff] %v617
    %634 = vst [vmem:[%s4 + $0x28] sm:$0xff] %v618
    %635 = vst [vmem:[%s4 + $0x30] sm:$0xff] %v619
    %636 = vst [vmem:[%s4 + $0x38] sm:$0xff] %v620
    %637 = vst [vmem:[%s4 + $0x40] sm:$0xff] %v621
    %638 = vst [vmem:[%s4 + $0x48] sm:$0xff] %v622
    %639 = vst [vmem:[%s4 + $0x50] sm:$0xff] %v623
    %640 = vst [vmem:[%s4 + $0x58] sm:$0xff] %v624
    %641 = vst [vmem:[%s4 + $0x60] sm:$0xff] %v625
    %642 = vst [vmem:[%s4 + $0x68] sm:$0xff] %v626
    %643 = vst [vmem:[%s4 + $0x70] sm:$0xff] %v627
    %644 = vst [vmem:[%s4 + $0x78] sm:$0xff] %v628
    // Predicated region
    $region100: #{graphsage2_forward_padded.5} parent=1 // pred_check
      _
    $region101: #{graphsage2_forward_padded.5} parent=1 // pred_check_branch
      %646 = sbr.rel (0) target = $region103
    $region102: #{graphsage2_forward_padded.5} parent=1 // pred_region
      _
    $region103: #{graphsage2_forward_padded.5} parent=1 // pred_fallthru
      _
    // Predicated region
    $region104: #{graphsage2_forward_padded.5} parent=1 // pred_check
      _
    $region105: #{graphsage2_forward_padded.5} parent=1 // pred_check_branch
      %648 = sbr.rel (0) target = $region107
    $region106: #{graphsage2_forward_padded.5} parent=1 // pred_region
      _
    $region107: #{graphsage2_forward_padded.5} parent=1 // pred_fallthru
      _

// kernel: graphsage2_forward_padded.3
$region0: #{graphsage2_forward_padded.3}
  #allocation0 [shape = 'u32[]', space=smem, size = 0x4, offset = 0x4, fixed_abs, tag = 'smem constant byte address 0x4 - core index']
  #allocation1 [shape = 'u32[144,128]{1,0:T(1,128)}', space=vmem, size = 0x12000, scoped, tag = 'internal scratch']
  %s0 = inlined_call_operand.hbm [shape: bf16[128,128], index: 0, kind: input, shape index: {}]
  %s1 = inlined_call_operand.hbm [shape: bf16[128,256], index: 1, kind: input, shape index: {}]
  %s2 = inlined_call_operand.vmem [shape: bf16[128,256], index: 2, kind: output, shape index: {}]
  %s3 = sld [smem:[#allocation0]]
  $region26: #{graphsage2_forward_padded.3} parent=0
    _
  %s5 = ssub.s32 1, %s3
  %s6 = scalar_select 0, %s5, %s3
  $region1: #{graphsage2_forward_padded.3} parent=0
    #allocation2 [shape = 'u8[32768]{0}', space=vmem, size = 0x8000, scoped, tag = 'input window, operand 0, single buffered']
    #allocation3 [shape = 's32[1]{0}', space=sflag, size = 0x4, scoped, tag = 'scoped memory for graphsage2_forward_padded.3']
    #allocation4 [shape = 'u8[65536]{0}', space=vmem, size = 0x10000, scoped, tag = 'input window, operand 1, single buffered']
    #allocation5 [shape = 's32[1]{0}', space=sflag, size = 0x4, scoped, tag = 'scoped memory for graphsage2_forward_padded.3']
    %7 = vsyncpa [#allocation3], 0
    %8 = vsyncpa [#allocation5], 0
    // Predicated region
    $region2: #{graphsage2_forward_padded.3} parent=1 // pred_check
      _
    $region3: #{graphsage2_forward_padded.3} parent=1 // pred_check_branch
      %10 = sbr.rel (0) target = $region5
    $region4: #{graphsage2_forward_padded.3} parent=1 // pred_region
      %s12 = ssub.s32 1024, 1024
      %13 = vsyncadd [#allocation3], %s12
      %s14 = sshll.u32 [#allocation2], 4
      %s15 = int_to_ptr.vmem [resolvable:$true] %s14
      %20 = dma.hbm_to_vmem [thread:$0]  %s0, 1024, %s15, [#allocation3], 64, 64, 4
    $region5: #{graphsage2_forward_padded.3} parent=1 // pred_fallthru
      _
    // Predicated region
    $region6: #{graphsage2_forward_padded.3} parent=1 // pred_check
      _
    $region7: #{graphsage2_forward_padded.3} parent=1 // pred_check_branch
      %22 = sbr.rel (0) target = $region9
    $region8: #{graphsage2_forward_padded.3} parent=1 // pred_region
      %s24 = ssub.s32 2048, 2048
      %25 = vsyncadd [#allocation5], %s24
      %s26 = sshll.u32 [#allocation4], 4
      %s27 = int_to_ptr.vmem [resolvable:$true] %s26
      %32 = dma.hbm_to_vmem [thread:$0]  %s1, 2048, %s27, [#allocation5], 128, 128, 8
    $region9: #{graphsage2_forward_padded.3} parent=1 // pred_fallthru
      _
    // Predicated region
    $region10: #{graphsage2_forward_padded.3} parent=1 // pred_check
      _
    $region11: #{graphsage2_forward_padded.3} parent=1 // pred_check_branch
      %34 = sbr.rel (0) target = $region13
    $region12: #{graphsage2_forward_padded.3} parent=1 // pred_region
      %35 = dma.done [#allocation3], 1024
    $region13: #{graphsage2_forward_padded.3} parent=1 // pred_fallthru
      _
    // Predicated region
    $region14: #{graphsage2_forward_padded.3} parent=1 // pred_check
      _
    $region15: #{graphsage2_forward_padded.3} parent=1 // pred_check_branch
      %37 = sbr.rel (0) target = $region17
    $region16: #{graphsage2_forward_padded.3} parent=1 // pred_region
      %38 = dma.done [#allocation5], 2048
    $region17: #{graphsage2_forward_padded.3} parent=1 // pred_fallthru
      _
    %v40 = vld [vmem:[#allocation2] sm:$0xf]
    %v41 = vld [vmem:[#allocation2 + $0x4] sm:$0xf]
    %v42 = vld [vmem:[#allocation2 + $0x8] sm:$0xf]
    %v43 = vld [vmem:[#allocation2 + $0xc] sm:$0xf]
    %v44 = vld [vmem:[#allocation2 + $0x10] sm:$0xf]
    %v45 = vld [vmem:[#allocation2 + $0x14] sm:$0xf]
    %v46 = vld [vmem:[#allocation2 + $0x18] sm:$0xf]
    %v47 = vld [vmem:[#allocation2 + $0x1c] sm:$0xf]
    %v48 = vld [vmem:[#allocation2 + $0x20] sm:$0xf]
    %v49 = vld [vmem:[#allocation2 + $0x24] sm:$0xf]
    %v50 = vld [vmem:[#allocation2 + $0x28] sm:$0xf]
    %v51 = vld [vmem:[#allocation2 + $0x2c] sm:$0xf]
    %v52 = vld [vmem:[#allocation2 + $0x30] sm:$0xf]
    %v53 = vld [vmem:[#allocation2 + $0x34] sm:$0xf]
    %v54 = vld [vmem:[#allocation2 + $0x38] sm:$0xf]
    %v55 = vld [vmem:[#allocation2 + $0x3c] sm:$0xf]
    %v56 = vld [vmem:[#allocation4] sm:$0xff]
    %v57 = vld [vmem:[#allocation4 + $0x8] sm:$0xff]
    %v58 = vld [vmem:[#allocation4 + $0x10] sm:$0xff]
    %v59 = vld [vmem:[#allocation4 + $0x18] sm:$0xff]
    %v60 = vld [vmem:[#allocation4 + $0x20] sm:$0xff]
    %v61 = vld [vmem:[#allocation4 + $0x28] sm:$0xff]
    %v62 = vld [vmem:[#allocation4 + $0x30] sm:$0xff]
    %v63 = vld [vmem:[#allocation4 + $0x38] sm:$0xff]
    %v64 = vld [vmem:[#allocation4 + $0x40] sm:$0xff]
    %v65 = vld [vmem:[#allocation4 + $0x48] sm:$0xff]
    %v66 = vld [vmem:[#allocation4 + $0x50] sm:$0xff]
    %v67 = vld [vmem:[#allocation4 + $0x58] sm:$0xff]
    %v68 = vld [vmem:[#allocation4 + $0x60] sm:$0xff]
    %v69 = vld [vmem:[#allocation4 + $0x68] sm:$0xff]
    %v70 = vld [vmem:[#allocation4 + $0x70] sm:$0xff]
    %v71 = vld [vmem:[#allocation4 + $0x78] sm:$0xff]
    %v88 = vunpack.c.l.b16 %v40
    %v89 = vunpack.c.l.b16 %v41
    %v90 = vunpack.c.l.b16 %v42
    %v91 = vunpack.c.l.b16 %v43
    %v92 = vunpack.c.l.b16 %v44
    %v93 = vunpack.c.l.b16 %v45
    %v94 = vunpack.c.l.b16 %v46
    %v95 = vunpack.c.l.b16 %v47
    %v96 = vunpack.c.l.b16 %v48
    %v97 = vunpack.c.l.b16 %v49
    %v98 = vunpack.c.l.b16 %v50
    %v99 = vunpack.c.l.b16 %v51
    %v100 = vunpack.c.l.b16 %v52
    %v101 = vunpack.c.l.b16 %v53
    %v102 = vunpack.c.l.b16 %v54
    %v103 = vunpack.c.l.b16 %v55
    %v104 = vpack.c.b16 %v89, %v88
    %v105 = vpack.c.b16 %v91, %v90
    %v106 = vpack.c.b16 %v93, %v92
    %v107 = vpack.c.b16 %v95, %v94
    %v108 = vpack.c.b16 %v97, %v96
    %v109 = vpack.c.b16 %v99, %v98
    %v110 = vpack.c.b16 %v101, %v100
    %v111 = vpack.c.b16 %v103, %v102
    %v136 = vunpack.c.l.b16 %v56
    %v137 = vunpack.c.h.b16 %v56
    %v138 = vunpack.c.l.b16 %v57
    %v139 = vunpack.c.h.b16 %v57
    %v140 = vunpack.c.l.b16 %v58
    %v141 = vunpack.c.h.b16 %v58
    %v142 = vunpack.c.l.b16 %v59
    %v143 = vunpack.c.h.b16 %v59
    %v144 = vunpack.c.l.b16 %v60
    %v145 = vunpack.c.h.b16 %v60
    %v146 = vunpack.c.l.b16 %v61
    %v147 = vunpack.c.h.b16 %v61
    %v148 = vunpack.c.l.b16 %v62
    %v149 = vunpack.c.h.b16 %v62
    %v150 = vunpack.c.l.b16 %v63
    %v151 = vunpack.c.h.b16 %v63
    %v152 = vunpack.c.l.b16 %v64
    %v153 = vunpack.c.h.b16 %v64
    %v154 = vunpack.c.l.b16 %v65
    %v155 = vunpack.c.h.b16 %v65
    %v156 = vunpack.c.l.b16 %v66
    %v157 = vunpack.c.h.b16 %v66
    %v158 = vunpack.c.l.b16 %v67
    %v159 = vunpack.c.h.b16 %v67
    %v160 = vunpack.c.l.b16 %v68
    %v161 = vunpack.c.h.b16 %v68
    %v162 = vunpack.c.l.b16 %v69
    %v163 = vunpack.c.h.b16 %v69
    %v164 = vunpack.c.l.b16 %v70
    %v165 = vunpack.c.h.b16 %v70
    %v166 = vunpack.c.l.b16 %v71
    %v167 = vunpack.c.h.b16 %v71
    %v168 = vpack.c.b16 %v138, %v136
    %v169 = vpack.c.b16 %v139, %v137
    %v170 = vpack.c.b16 %v142, %v140
    %v171 = vpack.c.b16 %v143, %v141
    %v172 = vpack.c.b16 %v146, %v144
    %v173 = vpack.c.b16 %v147, %v145
    %v174 = vpack.c.b16 %v150, %v148
    %v175 = vpack.c.b16 %v151, %v149
    %v176 = vpack.c.b16 %v154, %v152
    %v177 = vpack.c.b16 %v155, %v153
    %v178 = vpack.c.b16 %v158, %v156
    %v179 = vpack.c.b16 %v159, %v157
    %v180 = vpack.c.b16 %v162, %v160
    %v181 = vpack.c.b16 %v163, %v161
    %v182 = vpack.c.b16 %v166, %v164
    %v183 = vpack.c.b16 %v167, %v165
    %200 = vmatprep.subr.bf16.mxu0 %v169
    %201 = vmatpush1.bf16.msra.mxu0 %v168
    %202 = vmatprep.subr.bf16.mxu0 %v171
    %203 = vmatpush1.bf16.msra.mxu0 %v170
    %204 = vmatprep.subr.bf16.mxu0 %v173
    %205 = vmatpush1.bf16.msra.mxu0 %v172
    %206 = vmatprep.subr.bf16.mxu0 %v175
    %207 = vmatpush1.bf16.msra.mxu0 %v174
    %208 = vmatprep.subr.bf16.mxu0 %v177
    %209 = vmatpush1.bf16.msra.mxu0 %v176
    %210 = vmatprep.subr.bf16.mxu0 %v179
    %211 = vmatpush1.bf16.msra.mxu0 %v178
    %212 = vmatprep.subr.bf16.mxu0 %v181
    %213 = vmatpush1.bf16.msra.mxu0 %v180
    %214 = vmatprep.subr.bf16.mxu0 %v183
    %215 = vmatpush1.bf16.msra.mxu0 %v182
    %216 = vmatprep.subr.bf16.mxu0 0
    %217 = vmatpush1.bf16.msra.mxu0 0
    %218 = vmatprep.subr.bf16.mxu0 0
    %219 = vmatpush1.bf16.msra.mxu0 0
    %220 = vmatprep.subr.bf16.mxu0 0
    %221 = vmatpush1.bf16.msra.mxu0 0
    %222 = vmatprep.subr.bf16.mxu0 0
    %223 = vmatpush1.bf16.msra.mxu0 0
    %224 = vmatprep.subr.bf16.mxu0 0
    %225 = vmatpush1.bf16.msra.mxu0 0
    %226 = vmatprep.subr.bf16.mxu0 0
    %227 = vmatpush1.bf16.msra.mxu0 0
    %228 = vmatprep.subr.bf16.mxu0 0
    %229 = vmatpush1.bf16.msra.mxu0 0
    %230 = vmatprep.subr.bf16.mxu0 0
    %231 = vmatpush1.bf16.msra.mxu0 0
    %232 = vmatprep.mubr.bf16.mxu0 0
    %233 = vmatmul.mubr.bf16.gmra.mrb[0].mxu0 %v104
    %v234 = vpop.f32.mrb[0].mxu0
    %v235 = vadd.f32 0.0, %v234
    %v236 = vpop.f32.mrb[0].mxu0
    %v237 = vadd.f32 0.0, %v236
    %v238 = vpop.f32.mrb[0].mxu0
    %v239 = vadd.f32 0.0, %v238
    %v240 = vpop.f32.mrb[0].mxu0
    %v241 = vadd.f32 0.0, %v240
    %242 = vmatprep.mubr.bf16.mxu0 0
    %243 = vmatmul.mubr.bf16.gmra.mrb[0].mxu0 %v105
    %v244 = vpop.f32.mrb[0].mxu0
    %v245 = vadd.f32 0.0, %v244
    %v246 = vpop.f32.mrb[0].mxu0
    %v247 = vadd.f32 0.0, %v246
    %v248 = vpop.f32.mrb[0].mxu0
    %v249 = vadd.f32 0.0, %v248
    %v250 = vpop.f32.mrb[0].mxu0
    %v251 = vadd.f32 0.0, %v250
    %252 = vmatprep.mubr.bf16.mxu0 0
    %253 = vmatmul.mubr.bf16.gmra.mrb[0].mxu0 %v106
    %v254 = vpop.f32.mrb[0].mxu0
    %v255 = vadd.f32 0.0, %v254
    %v256 = vpop.f32.mrb[0].mxu0
    %v257 = vadd.f32 0.0, %v256
    %v258 = vpop.f32.mrb[0].mxu0
    %v259 = vadd.f32 0.0, %v258
    %v260 = vpop.f32.mrb[0].mxu0
    %v261 = vadd.f32 0.0, %v260
    %262 = vmatprep.mubr.bf16.mxu0 0
    %263 = vmatmul.mubr.bf16.gmra.mrb[0].mxu0 %v107
    %v264 = vpop.f32.mrb[0].mxu0
    %v265 = vadd.f32 0.0, %v264
    %v266 = vpop.f32.mrb[0].mxu0
    %v267 = vadd.f32 0.0, %v266
    %v268 = vpop.f32.mrb[0].mxu0
    %v269 = vadd.f32 0.0, %v268
    %v270 = vpop.f32.mrb[0].mxu0
    %v271 = vadd.f32 0.0, %v270
    %272 = vmatprep.mubr.bf16.mxu0 0
    %273 = vmatmul.mubr.bf16.gmra.mrb[0].mxu0 %v108
    %v274 = vpop.f32.mrb[0].mxu0
    %v275 = vadd.f32 0.0, %v274
    %v276 = vpop.f32.mrb[0].mxu0
    %v277 = vadd.f32 0.0, %v276
    %v278 = vpop.f32.mrb[0].mxu0
    %v279 = vadd.f32 0.0, %v278
    %v280 = vpop.f32.mrb[0].mxu0
    %v281 = vadd.f32 0.0, %v280
    %282 = vmatprep.mubr.bf16.mxu0 0
    %283 = vmatmul.mubr.bf16.gmra.mrb[0].mxu0 %v109
    %v284 = vpop.f32.mrb[0].mxu0
    %v285 = vadd.f32 0.0, %v284
    %v286 = vpop.f32.mrb[0].mxu0
    %v287 = vadd.f32 0.0, %v286
    %v288 = vpop.f32.mrb[0].mxu0
    %v289 = vadd.f32 0.0, %v288
    %v290 = vpop.f32.mrb[0].mxu0
    %v291 = vadd.f32 0.0, %v290
    %292 = vmatprep.mubr.bf16.mxu0 0
    %293 = vmatmul.mubr.bf16.gmra.mrb[0].mxu0 %v110
    %v294 = vpop.f32.mrb[0].mxu0
    %v295 = vadd.f32 0.0, %v294
    %v296 = vpop.f32.mrb[0].mxu0
    %v297 = vadd.f32 0.0, %v296
    %v298 = vpop.f32.mrb[0].mxu0
    %v299 = vadd.f32 0.0, %v298
    %v300 = vpop.f32.mrb[0].mxu0
    %v301 = vadd.f32 0.0, %v300
    %302 = vmatprep.mubr.bf16.mxu0 0
    %303 = vmatmul.mubr.bf16.gmra.mrb[0].mxu0 %v111
    %v304 = vpop.f32.mrb[0].mxu0
    %v305 = vadd.f32 0.0, %v304
    %v306 = vpop.f32.mrb[0].mxu0
    %v307 = vadd.f32 0.0, %v306
    %v308 = vpop.f32.mrb[0].mxu0
    %v309 = vadd.f32 0.0, %v308
    %v310 = vpop.f32.mrb[0].mxu0
    %v311 = vadd.f32 0.0, %v310
    %312 = vdwg.mxu0
    %v313 = vpack.c.bf16 %v239, %v235
    %v314 = vpack.c.bf16 %v241, %v237
    %v315 = vpack.c.bf16 %v249, %v245
    %v316 = vpack.c.bf16 %v251, %v247
    %v317 = vpack.c.bf16 %v259, %v255
    %v318 = vpack.c.bf16 %v261, %v257
    %v319 = vpack.c.bf16 %v269, %v265
    %v320 = vpack.c.bf16 %v271, %v267
    %v321 = vpack.c.bf16 %v279, %v275
    %v322 = vpack.c.bf16 %v281, %v277
    %v323 = vpack.c.bf16 %v289, %v285
    %v324 = vpack.c.bf16 %v291, %v287
    %v325 = vpack.c.bf16 %v299, %v295
    %v326 = vpack.c.bf16 %v301, %v297
    %v327 = vpack.c.bf16 %v309, %v305
    %v328 = vpack.c.bf16 %v311, %v307
    %v345 = vunpack.c.l.b16 %v313
    %v346 = vunpack.c.l.b16 %v314
    %v347 = vunpack.c.h.b16 %v313
    %v348 = vunpack.c.h.b16 %v314
    %v349 = vunpack.c.l.b16 %v315
    %v350 = vunpack.c.l.b16 %v316
    %v351 = vunpack.c.h.b16 %v315
    %v352 = vunpack.c.h.b16 %v316
    %v353 = vunpack.c.l.b16 %v317
    %v354 = vunpack.c.l.b16 %v318
    %v355 = vunpack.c.h.b16 %v317
    %v356 = vunpack.c.h.b16 %v318
    %v357 = vunpack.c.l.b16 %v319
    %v358 = vunpack.c.l.b16 %v320
    %v359 = vunpack.c.h.b16 %v319
    %v360 = vunpack.c.h.b16 %v320
    %v361 = vunpack.c.l.b16 %v321
    %v362 = vunpack.c.l.b16 %v322
    %v363 = vunpack.c.h.b16 %v321
    %v364 = vunpack.c.h.b16 %v322
    %v365 = vunpack.c.l.b16 %v323
    %v366 = vunpack.c.l.b16 %v324
    %v367 = vunpack.c.h.b16 %v323
    %v368 = vunpack.c.h.b16 %v324
    %v369 = vunpack.c.l.b16 %v325
    %v370 = vunpack.c.l.b16 %v326
    %v371 = vunpack.c.h.b16 %v325
    %v372 = vunpack.c.h.b16 %v326
    %v373 = vunpack.c.l.b16 %v327
    %v374 = vunpack.c.l.b16 %v328
    %v375 = vunpack.c.h.b16 %v327
    %v376 = vunpack.c.h.b16 %v328
    %v377 = vpack.c.b16 %v346, %v345
    %v378 = vpack.c.b16 %v348, %v347
    %v379 = vpack.c.b16 %v350, %v349
    %v380 = vpack.c.b16 %v352, %v351
    %v381 = vpack.c.b16 %v354, %v353
    %v382 = vpack.c.b16 %v356, %v355
    %v383 = vpack.c.b16 %v358, %v357
    %v384 = vpack.c.b16 %v360, %v359
    %v385 = vpack.c.b16 %v362, %v361
    %v386 = vpack.c.b16 %v364, %v363
    %v387 = vpack.c.b16 %v366, %v365
    %v388 = vpack.c.b16 %v368, %v367
    %v389 = vpack.c.b16 %v370, %v369
    %v390 = vpack.c.b16 %v372, %v371
    %v391 = vpack.c.b16 %v374, %v373
    %v392 = vpack.c.b16 %v376, %v375
    %409 = vst [vmem:[%s2] sm:$0xff] %v377
    %410 = vst [vmem:[%s2 + $0x8] sm:$0xff] %v378
    %411 = vst [vmem:[%s2 + $0x10] sm:$0xff] %v379
    %412 = vst [vmem:[%s2 + $0x18] sm:$0xff] %v380
    %413 = vst [vmem:[%s2 + $0x20] sm:$0xff] %v381
    %414 = vst [vmem:[%s2 + $0x28] sm:$0xff] %v382
    %415 = vst [vmem:[%s2 + $0x30] sm:$0xff] %v383
    %416 = vst [vmem:[%s2 + $0x38] sm:$0xff] %v384
    %417 = vst [vmem:[%s2 + $0x40] sm:$0xff] %v385
    %418 = vst [vmem:[%s2 + $0x48] sm:$0xff] %v386
    %419 = vst [vmem:[%s2 + $0x50] sm:$0xff] %v387
    %420 = vst [vmem:[%s2 + $0x58] sm:$0xff] %v388
    %421 = vst [vmem:[%s2 + $0x60] sm:$0xff] %v389
    %422 = vst [vmem:[%s2 + $0x68] sm:$0xff] %v390
    %423 = vst [vmem:[%s2 + $0x70] sm:$0xff] %v391
    %424 = vst [vmem:[%s2 + $0x78] sm:$0xff] %v392
    // Predicated region
    $region18: #{graphsage2_forward_padded.3} parent=1 // pred_check
      _
    $region19: #{graphsage2_forward_padded.3} parent=1 // pred_check_branch
      %426 = sbr.rel (0) target = $region21
    $region20: #{graphsage2_forward_padded.3} parent=1 // pred_region
      _
    $region21: #{graphsage2_forward_padded.3} parent=1 // pred_fallthru
      _
    // Predicated region
    $region22: #{graphsage2_forward_padded.3} parent=1 // pred_check
      _
    $region23: #{graphsage2_forward_padded.3} parent=1 // pred_check_branch
      %428 = sbr.rel (0) target = $region25
    $region24: #{graphsage2_forward_padded.3} parent=1 // pred_region
      _
    $region25: #{graphsage2_forward_padded.3} parent=1 // pred_fallthru
      _
    %429 = vsyncpa [#allocation3], 1
    %430 = vsyncpa [#allocation5], 1

// kernel: graphsage2_forward_padded.4
$region0: #{graphsage2_forward_padded.4}
  #allocation0 [shape = 'u32[]', space=smem, size = 0x4, offset = 0x4, fixed_abs, tag = 'smem constant byte address 0x4 - core index']
  #allocation1 [shape = 'u32[144,128]{1,0:T(1,128)}', space=vmem, size = 0x12000, scoped, tag = 'internal scratch']
  %s0 = inlined_call_operand.vmem [shape: bf16[128,128], index: 0, kind: input, shape index: {}]
  %s1 = inlined_call_operand.vmem [shape: bf16[128,256], index: 1, kind: input, shape index: {}, may-alias: {1,2}]
  %s2 = inlined_call_operand.vmem [shape: bf16[128,256], index: 2, kind: input, shape index: {}, may-alias: {1,2}]
  %s3 = inlined_call_operand.vmem [shape: f32[1,128], index: 3, kind: input, shape index: {}]
  %s4 = inlined_call_operand.vmem [shape: bf16[128,256], index: 4, kind: input, shape index: {}]
  %s5 = inlined_call_operand.vmem [shape: bf16[128,256], index: 5, kind: output, shape index: {}]
  %s6 = sld [smem:[#allocation0]]
  $region112: #{graphsage2_forward_padded.4} parent=0
    _
  %s8 = ssub.s32 1, %s6
  %s9 = scalar_select 0, %s8, %s6
  $region1: #{graphsage2_forward_padded.4} parent=0
    #allocation2 [shape = 'u8[32768]{0}', space=vmem, size = 0x8000, scoped, tag = 'input window, operand 1, single buffered']
    #allocation3 [shape = 'u8[32768]{0}', space=vmem, size = 0x8000, scoped, tag = 'input window, operand 2, single buffered']
    // Predicated region
    $region2: #{graphsage2_forward_padded.4} parent=1 // pred_check
      _
    $region3: #{graphsage2_forward_padded.4} parent=1 // pred_check_branch
      %11 = sbr.rel (0) target = $region5
    $region4: #{graphsage2_forward_padded.4} parent=1 // pred_region
      _
    $region5: #{graphsage2_forward_padded.4} parent=1 // pred_fallthru
      _
    // Predicated region
    $region6: #{graphsage2_forward_padded.4} parent=1 // pred_check
      _
    $region7: #{graphsage2_forward_padded.4} parent=1 // pred_check_branch
      %13 = sbr.rel (0) target = $region9
    $region8: #{graphsage2_forward_padded.4} parent=1 // pred_region
      // Predicated region
      $region10: #{graphsage2_forward_padded.4} parent=8 // pred_check
        _
      $region11: #{graphsage2_forward_padded.4} parent=8 // pred_check_branch
        %15 = sbr.rel (0) target = $region13
      $region12: #{graphsage2_forward_padded.4} parent=8 // pred_region
        // Predicated region
        $region14: #{graphsage2_forward_padded.4} parent=12 // pred_check
          _
        $region15: #{graphsage2_forward_padded.4} parent=12 // pred_check_branch
          %17 = sbr.rel target = $region17
        $region16: #{graphsage2_forward_padded.4} parent=12 // pred_region
          // Predicated region
          $region29: #{graphsage2_forward_padded.4} parent=16 // pred_check
            _
          $region30: #{graphsage2_forward_padded.4} parent=16 // pred_check_branch
            %62 = sbr.rel (0) target = $region32
          $region31: #{graphsage2_forward_padded.4} parent=16 // pred_region
            loop: start=0, step=1, limit=1
            $region33: #{graphsage2_forward_padded.4} parent=31 // loop_pre_header
              _
            $region34: #{graphsage2_forward_padded.4} parent=31 // loop_header
              %s64 = sphi 0, %s68
              %p65 = scmp.ge.s32.totalorder %s64, 1
              %s69 = sphi %s1, %s1
              %s70 = sphi [#allocation2], [#allocation2]
            $region35: #{graphsage2_forward_padded.4} parent=31 // loop_header_branch
              %67 = sbr.rel (%p65) target = $region39
            $region36: #{graphsage2_forward_padded.4} parent=31 // loop_body
              _
            $region37: #{graphsage2_forward_padded.4} parent=31 // loop_footer
              %s68 = sadd.s32 1, %s64
            $region38: #{graphsage2_forward_padded.4} parent=31 // loop_footer_branch
              %63 = sbr.rel target = $region34
            $region39: #{graphsage2_forward_padded.4} parent=31 // loop_exit
              _
            loop: start=0, step=1, limit=1
            $region40: #{graphsage2_forward_padded.4} parent=31 // loop_pre_header
              _
            $region41: #{graphsage2_forward_padded.4} parent=31 // loop_header
              %s73 = sphi 0, %s77
              %p74 = scmp.ge.s32.totalorder %s73, 1
              %s78 = sphi %s1, %s1
              %s79 = sphi [#allocation2], [#allocation2]
            $region42: #{graphsage2_forward_padded.4} parent=31 // loop_header_branch
              %76 = sbr.rel (%p74) target = $region46
            $region43: #{graphsage2_forward_padded.4} parent=31 // loop_body
              %v80 = vld [vmem:[%s78] sm:$0xf]
              %81 = vst [vmem:[%s79] sm:$0xf] %v80
              %v82 = vld [vmem:[%s78 + $0x8] sm:$0xf]
              %83 = vst [vmem:[%s79 + $0x4] sm:$0xf] %v82
              %v84 = vld [vmem:[%s78 + $0x10] sm:$0xf]
              %85 = vst [vmem:[%s79 + $0x8] sm:$0xf] %v84
              %v86 = vld [vmem:[%s78 + $0x18] sm:$0xf]
              %87 = vst [vmem:[%s79 + $0xc] sm:$0xf] %v86
              %v88 = vld [vmem:[%s78 + $0x20] sm:$0xf]
              %89 = vst [vmem:[%s79 + $0x10] sm:$0xf] %v88
              %v90 = vld [vmem:[%s78 + $0x28] sm:$0xf]
              %91 = vst [vmem:[%s79 + $0x14] sm:$0xf] %v90
              %v92 = vld [vmem:[%s78 + $0x30] sm:$0xf]
              %93 = vst [vmem:[%s79 + $0x18] sm:$0xf] %v92
              %v94 = vld [vmem:[%s78 + $0x38] sm:$0xf]
              %95 = vst [vmem:[%s79 + $0x1c] sm:$0xf] %v94
              %v96 = vld [vmem:[%s78 + $0x40] sm:$0xf]
              %97 = vst [vmem:[%s79 + $0x20] sm:$0xf] %v96
              %v98 = vld [vmem:[%s78 + $0x48] sm:$0xf]
              %99 = vst [vmem:[%s79 + $0x24] sm:$0xf] %v98
              %v100 = vld [vmem:[%s78 + $0x50] sm:$0xf]
              %101 = vst [vmem:[%s79 + $0x28] sm:$0xf] %v100
              %v102 = vld [vmem:[%s78 + $0x58] sm:$0xf]
              %103 = vst [vmem:[%s79 + $0x2c] sm:$0xf] %v102
              %v104 = vld [vmem:[%s78 + $0x60] sm:$0xf]
              %105 = vst [vmem:[%s79 + $0x30] sm:$0xf] %v104
              %v106 = vld [vmem:[%s78 + $0x68] sm:$0xf]
              %107 = vst [vmem:[%s79 + $0x34] sm:$0xf] %v106
              %v108 = vld [vmem:[%s78 + $0x70] sm:$0xf]
              %109 = vst [vmem:[%s79 + $0x38] sm:$0xf] %v108
              %v110 = vld [vmem:[%s78 + $0x78] sm:$0xf]
              %111 = vst [vmem:[%s79 + $0x3c] sm:$0xf] %v110
            $region44: #{graphsage2_forward_padded.4} parent=31 // loop_footer
              %s77 = sadd.s32 1, %s73
            $region45: #{graphsage2_forward_padded.4} parent=31 // loop_footer_branch
              %72 = sbr.rel target = $region41
            $region46: #{graphsage2_forward_padded.4} parent=31 // loop_exit
              _
          $region32: #{graphsage2_forward_padded.4} parent=16 // pred_fallthru
            _
        $region17: #{graphsage2_forward_padded.4} parent=12 // pred_fallthru
          _
        // Predicated region
        $region18: #{graphsage2_forward_padded.4} parent=12 // pred_check
          _
        $region19: #{graphsage2_forward_padded.4} parent=12 // pred_check_branch
          %19 = sbr.rel (0) target = $region21
        $region20: #{graphsage2_forward_padded.4} parent=12 // pred_region
          loop: start=0, step=1, limit=1
          $region22: #{graphsage2_forward_padded.4} parent=20 // loop_pre_header
            _
          $region23: #{graphsage2_forward_padded.4} parent=20 // loop_header
            %s22 = sphi 0, %s26
            %p23 = scmp.ge.s32.totalorder %s22, 1
            %s27 = sphi %s1, %s1
            %s28 = sphi [#allocation2], [#allocation2]
          $region24: #{graphsage2_forward_padded.4} parent=20 // loop_header_branch
            %25 = sbr.rel (%p23) target = $region28
          $region25: #{graphsage2_forward_padded.4} parent=20 // loop_body
            %v29 = vld [vmem:[%s27] sm:$0xf]
            %30 = vst [vmem:[%s28] sm:$0xf] %v29
            %v31 = vld [vmem:[%s27 + $0x8] sm:$0xf]
            %32 = vst [vmem:[%s28 + $0x4] sm:$0xf] %v31
            %v33 = vld [vmem:[%s27 + $0x10] sm:$0xf]
            %34 = vst [vmem:[%s28 + $0x8] sm:$0xf] %v33
            %v35 = vld [vmem:[%s27 + $0x18] sm:$0xf]
            %36 = vst [vmem:[%s28 + $0xc] sm:$0xf] %v35
            %v37 = vld [vmem:[%s27 + $0x20] sm:$0xf]
            %38 = vst [vmem:[%s28 + $0x10] sm:$0xf] %v37
            %v39 = vld [vmem:[%s27 + $0x28] sm:$0xf]
            %40 = vst [vmem:[%s28 + $0x14] sm:$0xf] %v39
            %v41 = vld [vmem:[%s27 + $0x30] sm:$0xf]
            %42 = vst [vmem:[%s28 + $0x18] sm:$0xf] %v41
            %v43 = vld [vmem:[%s27 + $0x38] sm:$0xf]
            %44 = vst [vmem:[%s28 + $0x1c] sm:$0xf] %v43
            %v45 = vld [vmem:[%s27 + $0x40] sm:$0xf]
            %46 = vst [vmem:[%s28 + $0x20] sm:$0xf] %v45
            %v47 = vld [vmem:[%s27 + $0x48] sm:$0xf]
            %48 = vst [vmem:[%s28 + $0x24] sm:$0xf] %v47
            %v49 = vld [vmem:[%s27 + $0x50] sm:$0xf]
            %50 = vst [vmem:[%s28 + $0x28] sm:$0xf] %v49
            %v51 = vld [vmem:[%s27 + $0x58] sm:$0xf]
            %52 = vst [vmem:[%s28 + $0x2c] sm:$0xf] %v51
            %v53 = vld [vmem:[%s27 + $0x60] sm:$0xf]
            %54 = vst [vmem:[%s28 + $0x30] sm:$0xf] %v53
            %v55 = vld [vmem:[%s27 + $0x68] sm:$0xf]
            %56 = vst [vmem:[%s28 + $0x34] sm:$0xf] %v55
            %v57 = vld [vmem:[%s27 + $0x70] sm:$0xf]
            %58 = vst [vmem:[%s28 + $0x38] sm:$0xf] %v57
            %v59 = vld [vmem:[%s27 + $0x78] sm:$0xf]
            %60 = vst [vmem:[%s28 + $0x3c] sm:$0xf] %v59
          $region26: #{graphsage2_forward_padded.4} parent=20 // loop_footer
            %s26 = sadd.s32 1, %s22
          $region27: #{graphsage2_forward_padded.4} parent=20 // loop_footer_branch
            %21 = sbr.rel target = $region23
          $region28: #{graphsage2_forward_padded.4} parent=20 // loop_exit
            _
        $region21: #{graphsage2_forward_padded.4} parent=12 // pred_fallthru
          _
      $region13: #{graphsage2_forward_padded.4} parent=8 // pred_fallthru
        _
      %112 = vnop
    $region9: #{graphsage2_forward_padded.4} parent=1 // pred_fallthru
      _
    // Predicated region
    $region47: #{graphsage2_forward_padded.4} parent=1 // pred_check
      _
    $region48: #{graphsage2_forward_padded.4} parent=1 // pred_check_branch
      %114 = sbr.rel (0) target = $region50
    $region49: #{graphsage2_forward_padded.4} parent=1 // pred_region
      %s115 = scalar_lea.vmem %s2, 4
      // Predicated region
      $region51: #{graphsage2_forward_padded.4} parent=49 // pred_check
        _
      $region52: #{graphsage2_forward_padded.4} parent=49 // pred_check_branch
        %117 = sbr.rel (0) target = $region54
      $region53: #{graphsage2_forward_padded.4} parent=49 // pred_region
        // Predicated region
        $region55: #{graphsage2_forward_padded.4} parent=53 // pred_check
          _
        $region56: #{graphsage2_forward_padded.4} parent=53 // pred_check_branch
          %119 = sbr.rel target = $region58
        $region57: #{graphsage2_forward_padded.4} parent=53 // pred_region
          // Predicated region
          $region70: #{graphsage2_forward_padded.4} parent=57 // pred_check
            _
          $region71: #{graphsage2_forward_padded.4} parent=57 // pred_check_branch
            %164 = sbr.rel (0) target = $region73
          $region72: #{graphsage2_forward_padded.4} parent=57 // pred_region
            loop: start=0, step=1, limit=1
            $region74: #{graphsage2_forward_padded.4} parent=72 // loop_pre_header
              _
            $region75: #{graphsage2_forward_padded.4} parent=72 // loop_header
              %s166 = sphi 0, %s170
              %p167 = scmp.ge.s32.totalorder %s166, 1
              %s171 = sphi %s115, %s115
              %s172 = sphi [#allocation3], [#allocation3]
            $region76: #{graphsage2_forward_padded.4} parent=72 // loop_header_branch
              %169 = sbr.rel (%p167) target = $region80
            $region77: #{graphsage2_forward_padded.4} parent=72 // loop_body
              _
            $region78: #{graphsage2_forward_padded.4} parent=72 // loop_footer
              %s170 = sadd.s32 1, %s166
            $region79: #{graphsage2_forward_padded.4} parent=72 // loop_footer_branch
              %165 = sbr.rel target = $region75
            $region80: #{graphsage2_forward_padded.4} parent=72 // loop_exit
              _
            loop: start=0, step=1, limit=1
            $region81: #{graphsage2_forward_padded.4} parent=72 // loop_pre_header
              _
            $region82: #{graphsage2_forward_padded.4} parent=72 // loop_header
              %s175 = sphi 0, %s179
              %p176 = scmp.ge.s32.totalorder %s175, 1
              %s180 = sphi %s115, %s115
              %s181 = sphi [#allocation3], [#allocation3]
            $region83: #{graphsage2_forward_padded.4} parent=72 // loop_header_branch
              %178 = sbr.rel (%p176) target = $region87
            $region84: #{graphsage2_forward_padded.4} parent=72 // loop_body
              %v182 = vld [vmem:[%s180] sm:$0xf]
              %183 = vst [vmem:[%s181] sm:$0xf] %v182
              %v184 = vld [vmem:[%s180 + $0x8] sm:$0xf]
              %185 = vst [vmem:[%s181 + $0x4] sm:$0xf] %v184
              %v186 = vld [vmem:[%s180 + $0x10] sm:$0xf]
              %187 = vst [vmem:[%s181 + $0x8] sm:$0xf] %v186
              %v188 = vld [vmem:[%s180 + $0x18] sm:$0xf]
              %189 = vst [vmem:[%s181 + $0xc] sm:$0xf] %v188
              %v190 = vld [vmem:[%s180 + $0x20] sm:$0xf]
              %191 = vst [vmem:[%s181 + $0x10] sm:$0xf] %v190
              %v192 = vld [vmem:[%s180 + $0x28] sm:$0xf]
              %193 = vst [vmem:[%s181 + $0x14] sm:$0xf] %v192
              %v194 = vld [vmem:[%s180 + $0x30] sm:$0xf]
              %195 = vst [vmem:[%s181 + $0x18] sm:$0xf] %v194
              %v196 = vld [vmem:[%s180 + $0x38] sm:$0xf]
              %197 = vst [vmem:[%s181 + $0x1c] sm:$0xf] %v196
              %v198 = vld [vmem:[%s180 + $0x40] sm:$0xf]
              %199 = vst [vmem:[%s181 + $0x20] sm:$0xf] %v198
              %v200 = vld [vmem:[%s180 + $0x48] sm:$0xf]
              %201 = vst [vmem:[%s181 + $0x24] sm:$0xf] %v200
              %v202 = vld [vmem:[%s180 + $0x50] sm:$0xf]
              %203 = vst [vmem:[%s181 + $0x28] sm:$0xf] %v202
              %v204 = vld [vmem:[%s180 + $0x58] sm:$0xf]
              %205 = vst [vmem:[%s181 + $0x2c] sm:$0xf] %v204
              %v206 = vld [vmem:[%s180 + $0x60] sm:$0xf]
              %207 = vst [vmem:[%s181 + $0x30] sm:$0xf] %v206
              %v208 = vld [vmem:[%s180 + $0x68] sm:$0xf]
              %209 = vst [vmem:[%s181 + $0x34] sm:$0xf] %v208
              %v210 = vld [vmem:[%s180 + $0x70] sm:$0xf]
              %211 = vst [vmem:[%s181 + $0x38] sm:$0xf] %v210
              %v212 = vld [vmem:[%s180 + $0x78] sm:$0xf]
              %213 = vst [vmem:[%s181 + $0x3c] sm:$0xf] %v212
            $region85: #{graphsage2_forward_padded.4} parent=72 // loop_footer
              %s179 = sadd.s32 1, %s175
            $region86: #{graphsage2_forward_padded.4} parent=72 // loop_footer_branch
              %174 = sbr.rel target = $region82
            $region87: #{graphsage2_forward_padded.4} parent=72 // loop_exit
              _
          $region73: #{graphsage2_forward_padded.4} parent=57 // pred_fallthru
            _
        $region58: #{graphsage2_forward_padded.4} parent=53 // pred_fallthru
          _
        // Predicated region
        $region59: #{graphsage2_forward_padded.4} parent=53 // pred_check
          _
        $region60: #{graphsage2_forward_padded.4} parent=53 // pred_check_branch
          %121 = sbr.rel (0) target = $region62
        $region61: #{graphsage2_forward_padded.4} parent=53 // pred_region
          loop: start=0, step=1, limit=1
          $region63: #{graphsage2_forward_padded.4} parent=61 // loop_pre_header
            _
          $region64: #{graphsage2_forward_padded.4} parent=61 // loop_header
            %s124 = sphi 0, %s128
            %p125 = scmp.ge.s32.totalorder %s124, 1
            %s129 = sphi %s115, %s115
            %s130 = sphi [#allocation3], [#allocation3]
          $region65: #{graphsage2_forward_padded.4} parent=61 // loop_header_branch
            %127 = sbr.rel (%p125) target = $region69
          $region66: #{graphsage2_forward_padded.4} parent=61 // loop_body
            %v131 = vld [vmem:[%s129] sm:$0xf]
            %132 = vst [vmem:[%s130] sm:$0xf] %v131
            %v133 = vld [vmem:[%s129 + $0x8] sm:$0xf]
            %134 = vst [vmem:[%s130 + $0x4] sm:$0xf] %v133
            %v135 = vld [vmem:[%s129 + $0x10] sm:$0xf]
            %136 = vst [vmem:[%s130 + $0x8] sm:$0xf] %v135
            %v137 = vld [vmem:[%s129 + $0x18] sm:$0xf]
            %138 = vst [vmem:[%s130 + $0xc] sm:$0xf] %v137
            %v139 = vld [vmem:[%s129 + $0x20] sm:$0xf]
            %140 = vst [vmem:[%s130 + $0x10] sm:$0xf] %v139
            %v141 = vld [vmem:[%s129 + $0x28] sm:$0xf]
            %142 = vst [vmem:[%s130 + $0x14] sm:$0xf] %v141
            %v143 = vld [vmem:[%s129 + $0x30] sm:$0xf]
            %144 = vst [vmem:[%s130 + $0x18] sm:$0xf] %v143
            %v145 = vld [vmem:[%s129 + $0x38] sm:$0xf]
            %146 = vst [vmem:[%s130 + $0x1c] sm:$0xf] %v145
            %v147 = vld [vmem:[%s129 + $0x40] sm:$0xf]
            %148 = vst [vmem:[%s130 + $0x20] sm:$0xf] %v147
            %v149 = vld [vmem:[%s129 + $0x48] sm:$0xf]
            %150 = vst [vmem:[%s130 + $0x24] sm:$0xf] %v149
            %v151 = vld [vmem:[%s129 + $0x50] sm:$0xf]
            %152 = vst [vmem:[%s130 + $0x28] sm:$0xf] %v151
            %v153 = vld [vmem:[%s129 + $0x58] sm:$0xf]
            %154 = vst [vmem:[%s130 + $0x2c] sm:$0xf] %v153
            %v155 = vld [vmem:[%s129 + $0x60] sm:$0xf]
            %156 = vst [vmem:[%s130 + $0x30] sm:$0xf] %v155
            %v157 = vld [vmem:[%s129 + $0x68] sm:$0xf]
            %158 = vst [vmem:[%s130 + $0x34] sm:$0xf] %v157
            %v159 = vld [vmem:[%s129 + $0x70] sm:$0xf]
            %160 = vst [vmem:[%s130 + $0x38] sm:$0xf] %v159
            %v161 = vld [vmem:[%s129 + $0x78] sm:$0xf]
            %162 = vst [vmem:[%s130 + $0x3c] sm:$0xf] %v161
          $region67: #{graphsage2_forward_padded.4} parent=61 // loop_footer
            %s128 = sadd.s32 1, %s124
          $region68: #{graphsage2_forward_padded.4} parent=61 // loop_footer_branch
            %123 = sbr.rel target = $region64
          $region69: #{graphsage2_forward_padded.4} parent=61 // loop_exit
            _
        $region62: #{graphsage2_forward_padded.4} parent=53 // pred_fallthru
          _
      $region54: #{graphsage2_forward_padded.4} parent=49 // pred_fallthru
        _
      %214 = vnop
    $region50: #{graphsage2_forward_padded.4} parent=1 // pred_fallthru
      _
    // Predicated region
    $region88: #{graphsage2_forward_padded.4} parent=1 // pred_check
      _
    $region89: #{graphsage2_forward_padded.4} parent=1 // pred_check_branch
      %216 = sbr.rel (0) target = $region91
    $region90: #{graphsage2_forward_padded.4} parent=1 // pred_region
      _
    $region91: #{graphsage2_forward_padded.4} parent=1 // pred_fallthru
      _
    // Predicated region
    $region92: #{graphsage2_forward_padded.4} parent=1 // pred_check
      _
    $region93: #{graphsage2_forward_padded.4} parent=1 // pred_check_branch
      %218 = sbr.rel (0) target = $region95
    $region94: #{graphsage2_forward_padded.4} parent=1 // pred_region
      _
    $region95: #{graphsage2_forward_padded.4} parent=1 // pred_fallthru
      _
    // Predicated region
    $region96: #{graphsage2_forward_padded.4} parent=1 // pred_check
      _
    $region97: #{graphsage2_forward_padded.4} parent=1 // pred_check_branch
      %220 = sbr.rel (0) target = $region99
    $region98: #{graphsage2_forward_padded.4} parent=1 // pred_region
      _
    $region99: #{graphsage2_forward_padded.4} parent=1 // pred_fallthru
      _
    // Predicated region
    $region100: #{graphsage2_forward_padded.4} parent=1 // pred_check
      _
    $region101: #{graphsage2_forward_padded.4} parent=1 // pred_check_branch
      %222 = sbr.rel (0) target = $region103
    $region102: #{graphsage2_forward_padded.4} parent=1 // pred_region
      _
    $region103: #{graphsage2_forward_padded.4} parent=1 // pred_fallthru
      _
    %v224 = vld [vmem:[%s0] sm:$0xf]
    %v225 = vld [vmem:[%s0 + $0x4] sm:$0xf]
    %v226 = vld [vmem:[%s0 + $0x8] sm:$0xf]
    %v227 = vld [vmem:[%s0 + $0xc] sm:$0xf]
    %v228 = vld [vmem:[%s0 + $0x10] sm:$0xf]
    %v229 = vld [vmem:[%s0 + $0x14] sm:$0xf]
    %v230 = vld [vmem:[%s0 + $0x18] sm:$0xf]
    %v231 = vld [vmem:[%s0 + $0x1c] sm:$0xf]
    %v232 = vld [vmem:[%s0 + $0x20] sm:$0xf]
    %v233 = vld [vmem:[%s0 + $0x24] sm:$0xf]
    %v234 = vld [vmem:[%s0 + $0x28] sm:$0xf]
    %v235 = vld [vmem:[%s0 + $0x2c] sm:$0xf]
    %v236 = vld [vmem:[%s0 + $0x30] sm:$0xf]
    %v237 = vld [vmem:[%s0 + $0x34] sm:$0xf]
    %v238 = vld [vmem:[%s0 + $0x38] sm:$0xf]
    %v239 = vld [vmem:[%s0 + $0x3c] sm:$0xf]
    %v240 = vunpack.c.l.bf16 %v224
    %v241 = vunpack.c.l.bf16 %v225
    %v242 = vunpack.c.l.bf16 %v226
    %v243 = vunpack.c.l.bf16 %v227
    %v244 = vunpack.c.l.bf16 %v228
    %v245 = vunpack.c.l.bf16 %v229
    %v246 = vunpack.c.l.bf16 %v230
    %v247 = vunpack.c.l.bf16 %v231
    %v248 = vunpack.c.l.bf16 %v232
    %v249 = vunpack.c.l.bf16 %v233
    %v250 = vunpack.c.l.bf16 %v234
    %v251 = vunpack.c.l.bf16 %v235
    %v252 = vunpack.c.l.bf16 %v236
    %v253 = vunpack.c.l.bf16 %v237
    %v254 = vunpack.c.l.bf16 %v238
    %v255 = vunpack.c.l.bf16 %v239
    %256 = vadd.xlane.f32.xlu0 %v240
    %v257 = vpop.xlane.xlu0 %256
    %258 = vadd.xlane.f32.xlu0 %v241
    %v259 = vpop.xlane.xlu0 %258
    %260 = vadd.xlane.f32.xlu0 %v242
    %v261 = vpop.xlane.xlu0 %260
    %262 = vadd.xlane.f32.xlu0 %v243
    %v263 = vpop.xlane.xlu0 %262
    %264 = vadd.xlane.f32.xlu0 %v244
    %v265 = vpop.xlane.xlu0 %264
    %266 = vadd.xlane.f32.xlu0 %v245
    %v267 = vpop.xlane.xlu0 %266
    %268 = vadd.xlane.f32.xlu0 %v246
    %v269 = vpop.xlane.xlu0 %268
    %270 = vadd.xlane.f32.xlu0 %v247
    %v271 = vpop.xlane.xlu0 %270
    %272 = vadd.xlane.f32.xlu0 %v248
    %v273 = vpop.xlane.xlu0 %272
    %274 = vadd.xlane.f32.xlu0 %v249
    %v275 = vpop.xlane.xlu0 %274
    %276 = vadd.xlane.f32.xlu0 %v250
    %v277 = vpop.xlane.xlu0 %276
    %278 = vadd.xlane.f32.xlu0 %v251
    %v279 = vpop.xlane.xlu0 %278
    %280 = vadd.xlane.f32.xlu0 %v252
    %v281 = vpop.xlane.xlu0 %280
    %282 = vadd.xlane.f32.xlu0 %v253
    %v283 = vpop.xlane.xlu0 %282
    %284 = vadd.xlane.f32.xlu0 %v254
    %v285 = vpop.xlane.xlu0 %284
    %286 = vadd.xlane.f32.xlu0 %v255
    %v287 = vpop.xlane.xlu0 %286
    %v288 = vmax.f32 %v257, 1.0
    %v289 = vmax.f32 %v259, 1.0
    %v290 = vmax.f32 %v261, 1.0
    %v291 = vmax.f32 %v263, 1.0
    %v292 = vmax.f32 %v265, 1.0
    %v293 = vmax.f32 %v267, 1.0
    %v294 = vmax.f32 %v269, 1.0
    %v295 = vmax.f32 %v271, 1.0
    %v296 = vmax.f32 %v273, 1.0
    %v297 = vmax.f32 %v275, 1.0
    %v298 = vmax.f32 %v277, 1.0
    %v299 = vmax.f32 %v279, 1.0
    %v300 = vmax.f32 %v281, 1.0
    %v301 = vmax.f32 %v283, 1.0
    %v302 = vmax.f32 %v285, 1.0
    %v303 = vmax.f32 %v287, 1.0
    %v304 = vrcp.pop %v288
    %v305 = vmul.f32 1.0, %v304
    %v306 = vrcp.pop %v289
    %v307 = vmul.f32 1.0, %v306
    %v308 = vrcp.pop %v290
    %v309 = vmul.f32 1.0, %v308
    %v310 = vrcp.pop %v291
    %v311 = vmul.f32 1.0, %v310
    %v312 = vrcp.pop %v292
    %v313 = vmul.f32 1.0, %v312
    %v314 = vrcp.pop %v293
    %v315 = vmul.f32 1.0, %v314
    %v316 = vrcp.pop %v294
    %v317 = vmul.f32 1.0, %v316
    %v318 = vrcp.pop %v295
    %v319 = vmul.f32 1.0, %v318
    %v320 = vrcp.pop %v296
    %v321 = vmul.f32 1.0, %v320
    %v322 = vrcp.pop %v297
    %v323 = vmul.f32 1.0, %v322
    %v324 = vrcp.pop %v298
    %v325 = vmul.f32 1.0, %v324
    %v326 = vrcp.pop %v299
    %v327 = vmul.f32 1.0, %v326
    %v328 = vrcp.pop %v300
    %v329 = vmul.f32 1.0, %v328
    %v330 = vrcp.pop %v301
    %v331 = vmul.f32 1.0, %v330
    %v332 = vrcp.pop %v302
    %v333 = vmul.f32 1.0, %v332
    %v334 = vrcp.pop %v303
    %v335 = vmul.f32 1.0, %v334
    %v336 = vld [vmem:[#allocation2] sm:$0xf]
    %v337 = vld [vmem:[#allocation2 + $0x4] sm:$0xf]
    %v338 = vld [vmem:[#allocation2 + $0x8] sm:$0xf]
    %v339 = vld [vmem:[#allocation2 + $0xc] sm:$0xf]
    %v340 = vld [vmem:[#allocation2 + $0x10] sm:$0xf]
    %v341 = vld [vmem:[#allocation2 + $0x14] sm:$0xf]
    %v342 = vld [vmem:[#allocation2 + $0x18] sm:$0xf]
    %v343 = vld [vmem:[#allocation2 + $0x1c] sm:$0xf]
    %v344 = vld [vmem:[#allocation2 + $0x20] sm:$0xf]
    %v345 = vld [vmem:[#allocation2 + $0x24] sm:$0xf]
    %v346 = vld [vmem:[#allocation2 + $0x28] sm:$0xf]
    %v347 = vld [vmem:[#allocation2 + $0x2c] sm:$0xf]
    %v348 = vld [vmem:[#allocation2 + $0x30] sm:$0xf]
    %v349 = vld [vmem:[#allocation2 + $0x34] sm:$0xf]
    %v350 = vld [vmem:[#allocation2 + $0x38] sm:$0xf]
    %v351 = vld [vmem:[#allocation2 + $0x3c] sm:$0xf]
    %v368 = vunpack.c.l.b16 %v224
    %v369 = vunpack.c.l.b16 %v225
    %v370 = vunpack.c.l.b16 %v226
    %v371 = vunpack.c.l.b16 %v227
    %v372 = vunpack.c.l.b16 %v228
    %v373 = vunpack.c.l.b16 %v229
    %v374 = vunpack.c.l.b16 %v230
    %v375 = vunpack.c.l.b16 %v231
    %v376 = vunpack.c.l.b16 %v232
    %v377 = vunpack.c.l.b16 %v233
    %v378 = vunpack.c.l.b16 %v234
    %v379 = vunpack.c.l.b16 %v235
    %v380 = vunpack.c.l.b16 %v236
    %v381 = vunpack.c.l.b16 %v237
    %v382 = vunpack.c.l.b16 %v238
    %v383 = vunpack.c.l.b16 %v239
    %v384 = vpack.c.b16 %v369, %v368
    %v385 = vpack.c.b16 %v371, %v370
    %v386 = vpack.c.b16 %v373, %v372
    %v387 = vpack.c.b16 %v375, %v374
    %v388 = vpack.c.b16 %v377, %v376
    %v389 = vpack.c.b16 %v379, %v378
    %v390 = vpack.c.b16 %v381, %v380
    %v391 = vpack.c.b16 %v383, %v382
    %v416 = vunpack.c.l.b16 %v336
    %v417 = vunpack.c.l.b16 %v337
    %v418 = vunpack.c.l.b16 %v338
    %v419 = vunpack.c.l.b16 %v339
    %v420 = vunpack.c.l.b16 %v340
    %v421 = vunpack.c.l.b16 %v341
    %v422 = vunpack.c.l.b16 %v342
    %v423 = vunpack.c.l.b16 %v343
    %v424 = vunpack.c.l.b16 %v344
    %v425 = vunpack.c.l.b16 %v345
    %v426 = vunpack.c.l.b16 %v346
    %v427 = vunpack.c.l.b16 %v347
    %v428 = vunpack.c.l.b16 %v348
    %v429 = vunpack.c.l.b16 %v349
    %v430 = vunpack.c.l.b16 %v350
    %v431 = vunpack.c.l.b16 %v351
    %v432 = vpack.c.b16 %v417, %v416
    %v433 = vpack.c.b16 %v419, %v418
    %v434 = vpack.c.b16 %v421, %v420
    %v435 = vpack.c.b16 %v423, %v422
    %v436 = vpack.c.b16 %v425, %v424
    %v437 = vpack.c.b16 %v427, %v426
    %v438 = vpack.c.b16 %v429, %v428
    %v439 = vpack.c.b16 %v431, %v430
    %448 = vmatprep.subr.bf16.mxu0 0
    %449 = vmatpush1.bf16.msra.mxu0 %v432
    %450 = vmatprep.subr.bf16.mxu0 0
    %451 = vmatpush1.bf16.msra.mxu0 %v433
    %452 = vmatprep.subr.bf16.mxu0 0
    %453 = vmatpush1.bf16.msra.mxu0 %v434
    %454 = vmatprep.subr.bf16.mxu0 0
    %455 = vmatpush1.bf16.msra.mxu0 %v435
    %456 = vmatprep.subr.bf16.mxu0 0
    %457 = vmatpush1.bf16.msra.mxu0 %v436
    %458 = vmatprep.subr.bf16.mxu0 0
    %459 = vmatpush1.bf16.msra.mxu0 %v437
    %460 = vmatprep.subr.bf16.mxu0 0
    %461 = vmatpush1.bf16.msra.mxu0 %v438
    %462 = vmatprep.subr.bf16.mxu0 0
    %463 = vmatpush1.bf16.msra.mxu0 %v439
    %464 = vmatprep.subr.bf16.mxu0 0
    %465 = vmatpush1.bf16.msra.mxu0 0
    %466 = vmatprep.subr.bf16.mxu0 0
    %467 = vmatpush1.bf16.msra.mxu0 0
    %468 = vmatprep.subr.bf16.mxu0 0
    %469 = vmatpush1.bf16.msra.mxu0 0
    %470 = vmatprep.subr.bf16.mxu0 0
    %471 = vmatpush1.bf16.msra.mxu0 0
    %472 = vmatprep.subr.bf16.mxu0 0
    %473 = vmatpush1.bf16.msra.mxu0 0
    %474 = vmatprep.subr.bf16.mxu0 0
    %475 = vmatpush1.bf16.msra.mxu0 0
    %476 = vmatprep.subr.bf16.mxu0 0
    %477 = vmatpush1.bf16.msra.mxu0 0
    %478 = vmatprep.subr.bf16.mxu0 0
    %479 = vmatpush1.bf16.msra.mxu0 0
    %480 = vmatprep.mubr.bf16.mxu0 0
    %481 = vmatmul.mubr.bf16.gmra.mrb[0].mxu0 %v384
    %v482 = vpop.f32.mrb[0].mxu0
    %v483 = vadd.f32 0.0, %v482
    %v484 = vpop.f32.mrb[0].mxu0
    %v485 = vpop.f32.mrb[0].mxu0
    %v486 = vadd.f32 0.0, %v485
    %v487 = vpop.f32.mrb[0].mxu0
    %488 = vmatprep.mubr.bf16.mxu0 0
    %489 = vmatmul.mubr.bf16.gmra.mrb[0].mxu0 %v385
    %v490 = vpop.f32.mrb[0].mxu0
    %v491 = vadd.f32 0.0, %v490
    %v492 = vpop.f32.mrb[0].mxu0
    %v493 = vpop.f32.mrb[0].mxu0
    %v494 = vadd.f32 0.0, %v493
    %v495 = vpop.f32.mrb[0].mxu0
    %496 = vmatprep.mubr.bf16.mxu0 0
    %497 = vmatmul.mubr.bf16.gmra.mrb[0].mxu0 %v386
    %v498 = vpop.f32.mrb[0].mxu0
    %v499 = vadd.f32 0.0, %v498
    %v500 = vpop.f32.mrb[0].mxu0
    %v501 = vpop.f32.mrb[0].mxu0
    %v502 = vadd.f32 0.0, %v501
    %v503 = vpop.f32.mrb[0].mxu0
    %504 = vmatprep.mubr.bf16.mxu0 0
    %505 = vmatmul.mubr.bf16.gmra.mrb[0].mxu0 %v387
    %v506 = vpop.f32.mrb[0].mxu0
    %v507 = vadd.f32 0.0, %v506
    %v508 = vpop.f32.mrb[0].mxu0
    %v509 = vpop.f32.mrb[0].mxu0
    %v510 = vadd.f32 0.0, %v509
    %v511 = vpop.f32.mrb[0].mxu0
    %512 = vmatprep.mubr.bf16.mxu0 0
    %513 = vmatmul.mubr.bf16.gmra.mrb[0].mxu0 %v388
    %v514 = vpop.f32.mrb[0].mxu0
    %v515 = vadd.f32 0.0, %v514
    %v516 = vpop.f32.mrb[0].mxu0
    %v517 = vpop.f32.mrb[0].mxu0
    %v518 = vadd.f32 0.0, %v517
    %v519 = vpop.f32.mrb[0].mxu0
    %520 = vmatprep.mubr.bf16.mxu0 0
    %521 = vmatmul.mubr.bf16.gmra.mrb[0].mxu0 %v389
    %v522 = vpop.f32.mrb[0].mxu0
    %v523 = vadd.f32 0.0, %v522
    %v524 = vpop.f32.mrb[0].mxu0
    %v525 = vpop.f32.mrb[0].mxu0
    %v526 = vadd.f32 0.0, %v525
    %v527 = vpop.f32.mrb[0].mxu0
    %528 = vmatprep.mubr.bf16.mxu0 0
    %529 = vmatmul.mubr.bf16.gmra.mrb[0].mxu0 %v390
    %v530 = vpop.f32.mrb[0].mxu0
    %v531 = vadd.f32 0.0, %v530
    %v532 = vpop.f32.mrb[0].mxu0
    %v533 = vpop.f32.mrb[0].mxu0
    %v534 = vadd.f32 0.0, %v533
    %v535 = vpop.f32.mrb[0].mxu0
    %536 = vmatprep.mubr.bf16.mxu0 0
    %537 = vmatmul.mubr.bf16.gmra.mrb[0].mxu0 %v391
    %v538 = vpop.f32.mrb[0].mxu0
    %v539 = vadd.f32 0.0, %v538
    %v540 = vpop.f32.mrb[0].mxu0
    %v541 = vpop.f32.mrb[0].mxu0
    %v542 = vadd.f32 0.0, %v541
    %v543 = vpop.f32.mrb[0].mxu0
    %544 = vdwg.mxu0
    %v545 = vmul.f32 %v483, %v305
    %v546 = vmul.f32 %v486, %v307
    %v547 = vmul.f32 %v491, %v309
    %v548 = vmul.f32 %v494, %v311
    %v549 = vmul.f32 %v499, %v313
    %v550 = vmul.f32 %v502, %v315
    %v551 = vmul.f32 %v507, %v317
    %v552 = vmul.f32 %v510, %v319
    %v553 = vmul.f32 %v515, %v321
    %v554 = vmul.f32 %v518, %v323
    %v555 = vmul.f32 %v523, %v325
    %v556 = vmul.f32 %v526, %v327
    %v557 = vmul.f32 %v531, %v329
    %v558 = vmul.f32 %v534, %v331
    %v559 = vmul.f32 %v539, %v333
    %v560 = vmul.f32 %v542, %v335
    %v561 = vld [vmem:[#allocation3] sm:$0xf]
    %v562 = vld [vmem:[#allocation3 + $0x4] sm:$0xf]
    %v563 = vld [vmem:[#allocation3 + $0x8] sm:$0xf]
    %v564 = vld [vmem:[#allocation3 + $0xc] sm:$0xf]
    %v565 = vld [vmem:[#allocation3 + $0x10] sm:$0xf]
    %v566 = vld [vmem:[#allocation3 + $0x14] sm:$0xf]
    %v567 = vld [vmem:[#allocation3 + $0x18] sm:$0xf]
    %v568 = vld [vmem:[#allocation3 + $0x1c] sm:$0xf]
    %v569 = vld [vmem:[#allocation3 + $0x20] sm:$0xf]
    %v570 = vld [vmem:[#allocation3 + $0x24] sm:$0xf]
    %v571 = vld [vmem:[#allocation3 + $0x28] sm:$0xf]
    %v572 = vld [vmem:[#allocation3 + $0x2c] sm:$0xf]
    %v573 = vld [vmem:[#allocation3 + $0x30] sm:$0xf]
    %v574 = vld [vmem:[#allocation3 + $0x34] sm:$0xf]
    %v575 = vld [vmem:[#allocation3 + $0x38] sm:$0xf]
    %v576 = vld [vmem:[#allocation3 + $0x3c] sm:$0xf]
    %v577 = vunpack.c.l.bf16 %v561
    %v578 = vunpack.c.l.bf16 %v562
    %v579 = vunpack.c.l.bf16 %v563
    %v580 = vunpack.c.l.bf16 %v564
    %v581 = vunpack.c.l.bf16 %v565
    %v582 = vunpack.c.l.bf16 %v566
    %v583 = vunpack.c.l.bf16 %v567
    %v584 = vunpack.c.l.bf16 %v568
    %v585 = vunpack.c.l.bf16 %v569
    %v586 = vunpack.c.l.bf16 %v570
    %v587 = vunpack.c.l.bf16 %v571
    %v588 = vunpack.c.l.bf16 %v572
    %v589 = vunpack.c.l.bf16 %v573
    %v590 = vunpack.c.l.bf16 %v574
    %v591 = vunpack.c.l.bf16 %v575
    %v592 = vunpack.c.l.bf16 %v576
    %v593 = vadd.f32 %v545, %v577
    %v594 = vadd.f32 %v546, %v578
    %v595 = vadd.f32 %v547, %v579
    %v596 = vadd.f32 %v548, %v580
    %v597 = vadd.f32 %v549, %v581
    %v598 = vadd.f32 %v550, %v582
    %v599 = vadd.f32 %v551, %v583
    %v600 = vadd.f32 %v552, %v584
    %v601 = vadd.f32 %v553, %v585
    %v602 = vadd.f32 %v554, %v586
    %v603 = vadd.f32 %v555, %v587
    %v604 = vadd.f32 %v556, %v588
    %v605 = vadd.f32 %v557, %v589
    %v606 = vadd.f32 %v558, %v590
    %v607 = vadd.f32 %v559, %v591
    %v608 = vadd.f32 %v560, %v592
    %v609 = vld [vmem:[%s3] sm:$0x1]
    %v611 = vlaneseq
    %v612 = vshrl.u32 %v611, 7
    %v613 = vsub.s32 0, %v612
    %v614 = vrot.slane %v609, %v613
    %v616 = vadd.f32 %v593, %v614
    %v617 = vadd.f32 %v594, %v614
    %v618 = vadd.f32 %v595, %v614
    %v619 = vadd.f32 %v596, %v614
    %v620 = vadd.f32 %v597, %v614
    %v621 = vadd.f32 %v598, %v614
    %v622 = vadd.f32 %v599, %v614
    %v623 = vadd.f32 %v600, %v614
    %v624 = vadd.f32 %v601, %v614
    %v625 = vadd.f32 %v602, %v614
    %v626 = vadd.f32 %v603, %v614
    %v627 = vadd.f32 %v604, %v614
    %v628 = vadd.f32 %v605, %v614
    %v629 = vadd.f32 %v606, %v614
    %v630 = vadd.f32 %v607, %v614
    %v631 = vadd.f32 %v608, %v614
    %v632 = vmax.f32 %v616, 0.0
    %v633 = vmax.f32 %v617, 0.0
    %v634 = vmax.f32 %v618, 0.0
    %v635 = vmax.f32 %v619, 0.0
    %v636 = vmax.f32 %v620, 0.0
    %v637 = vmax.f32 %v621, 0.0
    %v638 = vmax.f32 %v622, 0.0
    %v639 = vmax.f32 %v623, 0.0
    %v640 = vmax.f32 %v624, 0.0
    %v641 = vmax.f32 %v625, 0.0
    %v642 = vmax.f32 %v626, 0.0
    %v643 = vmax.f32 %v627, 0.0
    %v644 = vmax.f32 %v628, 0.0
    %v645 = vmax.f32 %v629, 0.0
    %v646 = vmax.f32 %v630, 0.0
    %v647 = vmax.f32 %v631, 0.0
    %v648 = vpack.c.bf16 %v633, %v632
    %v649 = vpack.c.bf16 %v635, %v634
    %v650 = vpack.c.bf16 %v637, %v636
    %v651 = vpack.c.bf16 %v639, %v638
    %v652 = vpack.c.bf16 %v641, %v640
    %v653 = vpack.c.bf16 %v643, %v642
    %v654 = vpack.c.bf16 %v645, %v644
    %v655 = vpack.c.bf16 %v647, %v646
    %v656 = vld [vmem:[%s4] sm:$0xff]
    %v657 = vld [vmem:[%s4 + $0x8] sm:$0xff]
    %v658 = vld [vmem:[%s4 + $0x10] sm:$0xff]
    %v659 = vld [vmem:[%s4 + $0x18] sm:$0xff]
    %v660 = vld [vmem:[%s4 + $0x20] sm:$0xff]
    %v661 = vld [vmem:[%s4 + $0x28] sm:$0xff]
    %v662 = vld [vmem:[%s4 + $0x30] sm:$0xff]
    %v663 = vld [vmem:[%s4 + $0x38] sm:$0xff]
    %v664 = vld [vmem:[%s4 + $0x40] sm:$0xff]
    %v665 = vld [vmem:[%s4 + $0x48] sm:$0xff]
    %v666 = vld [vmem:[%s4 + $0x50] sm:$0xff]
    %v667 = vld [vmem:[%s4 + $0x58] sm:$0xff]
    %v668 = vld [vmem:[%s4 + $0x60] sm:$0xff]
    %v669 = vld [vmem:[%s4 + $0x68] sm:$0xff]
    %v670 = vld [vmem:[%s4 + $0x70] sm:$0xff]
    %v671 = vld [vmem:[%s4 + $0x78] sm:$0xff]
    %v688 = vunpack.c.l.b16 %v656
    %v689 = vunpack.c.h.b16 %v656
    %v690 = vunpack.c.l.b16 %v657
    %v691 = vunpack.c.h.b16 %v657
    %v692 = vunpack.c.l.b16 %v658
    %v693 = vunpack.c.h.b16 %v658
    %v694 = vunpack.c.l.b16 %v659
    %v695 = vunpack.c.h.b16 %v659
    %v696 = vunpack.c.l.b16 %v660
    %v697 = vunpack.c.h.b16 %v660
    %v698 = vunpack.c.l.b16 %v661
    %v699 = vunpack.c.h.b16 %v661
    %v700 = vunpack.c.l.b16 %v662
    %v701 = vunpack.c.h.b16 %v662
    %v702 = vunpack.c.l.b16 %v663
    %v703 = vunpack.c.h.b16 %v663
    %v704 = vunpack.c.l.b16 %v664
    %v705 = vunpack.c.h.b16 %v664
    %v706 = vunpack.c.l.b16 %v665
    %v707 = vunpack.c.h.b16 %v665
    %v708 = vunpack.c.l.b16 %v666
    %v709 = vunpack.c.h.b16 %v666
    %v710 = vunpack.c.l.b16 %v667
    %v711 = vunpack.c.h.b16 %v667
    %v712 = vunpack.c.l.b16 %v668
    %v713 = vunpack.c.h.b16 %v668
    %v714 = vunpack.c.l.b16 %v669
    %v715 = vunpack.c.h.b16 %v669
    %v716 = vunpack.c.l.b16 %v670
    %v717 = vunpack.c.h.b16 %v670
    %v718 = vunpack.c.l.b16 %v671
    %v719 = vunpack.c.h.b16 %v671
    %v720 = vpack.c.b16 %v690, %v688
    %v721 = vpack.c.b16 %v691, %v689
    %v722 = vpack.c.b16 %v694, %v692
    %v723 = vpack.c.b16 %v695, %v693
    %v724 = vpack.c.b16 %v698, %v696
    %v725 = vpack.c.b16 %v699, %v697
    %v726 = vpack.c.b16 %v702, %v700
    %v727 = vpack.c.b16 %v703, %v701
    %v728 = vpack.c.b16 %v706, %v704
    %v729 = vpack.c.b16 %v707, %v705
    %v730 = vpack.c.b16 %v710, %v708
    %v731 = vpack.c.b16 %v711, %v709
    %v732 = vpack.c.b16 %v714, %v712
    %v733 = vpack.c.b16 %v715, %v713
    %v734 = vpack.c.b16 %v718, %v716
    %v735 = vpack.c.b16 %v719, %v717
    %752 = vmatprep.subr.bf16.mxu0 %v721
    %753 = vmatpush1.bf16.msra.mxu0 %v720
    %754 = vmatprep.subr.bf16.mxu0 %v723
    %755 = vmatpush1.bf16.msra.mxu0 %v722
    %756 = vmatprep.subr.bf16.mxu0 %v725
    %757 = vmatpush1.bf16.msra.mxu0 %v724
    %758 = vmatprep.subr.bf16.mxu0 %v727
    %759 = vmatpush1.bf16.msra.mxu0 %v726
    %760 = vmatprep.subr.bf16.mxu0 %v729
    %761 = vmatpush1.bf16.msra.mxu0 %v728
    %762 = vmatprep.subr.bf16.mxu0 %v731
    %763 = vmatpush1.bf16.msra.mxu0 %v730
    %764 = vmatprep.subr.bf16.mxu0 %v733
    %765 = vmatpush1.bf16.msra.mxu0 %v732
    %766 = vmatprep.subr.bf16.mxu0 %v735
    %767 = vmatpush1.bf16.msra.mxu0 %v734
    %768 = vmatprep.subr.bf16.mxu0 0
    %769 = vmatpush1.bf16.msra.mxu0 0
    %770 = vmatprep.subr.bf16.mxu0 0
    %771 = vmatpush1.bf16.msra.mxu0 0
    %772 = vmatprep.subr.bf16.mxu0 0
    %773 = vmatpush1.bf16.msra.mxu0 0
    %774 = vmatprep.subr.bf16.mxu0 0
    %775 = vmatpush1.bf16.msra.mxu0 0
    %776 = vmatprep.subr.bf16.mxu0 0
    %777 = vmatpush1.bf16.msra.mxu0 0
    %778 = vmatprep.subr.bf16.mxu0 0
    %779 = vmatpush1.bf16.msra.mxu0 0
    %780 = vmatprep.subr.bf16.mxu0 0
    %781 = vmatpush1.bf16.msra.mxu0 0
    %782 = vmatprep.subr.bf16.mxu0 0
    %783 = vmatpush1.bf16.msra.mxu0 0
    %784 = vmatprep.mubr.bf16.mxu0 0
    %785 = vmatmul.mubr.bf16.gmra.mrb[0].mxu0 %v648
    %v786 = vpop.f32.mrb[0].mxu0
    %v787 = vadd.f32 0.0, %v786
    %v788 = vpop.f32.mrb[0].mxu0
    %v789 = vadd.f32 0.0, %v788
    %v790 = vpop.f32.mrb[0].mxu0
    %v791 = vadd.f32 0.0, %v790
    %v792 = vpop.f32.mrb[0].mxu0
    %v793 = vadd.f32 0.0, %v792
    %794 = vmatprep.mubr.bf16.mxu0 0
    %795 = vmatmul.mubr.bf16.gmra.mrb[0].mxu0 %v649
    %v796 = vpop.f32.mrb[0].mxu0
    %v797 = vadd.f32 0.0, %v796
    %v798 = vpop.f32.mrb[0].mxu0
    %v799 = vadd.f32 0.0, %v798
    %v800 = vpop.f32.mrb[0].mxu0
    %v801 = vadd.f32 0.0, %v800
    %v802 = vpop.f32.mrb[0].mxu0
    %v803 = vadd.f32 0.0, %v802
    %804 = vmatprep.mubr.bf16.mxu0 0
    %805 = vmatmul.mubr.bf16.gmra.mrb[0].mxu0 %v650
    %v806 = vpop.f32.mrb[0].mxu0
    %v807 = vadd.f32 0.0, %v806
    %v808 = vpop.f32.mrb[0].mxu0
    %v809 = vadd.f32 0.0, %v808
    %v810 = vpop.f32.mrb[0].mxu0
    %v811 = vadd.f32 0.0, %v810
    %v812 = vpop.f32.mrb[0].mxu0
    %v813 = vadd.f32 0.0, %v812
    %814 = vmatprep.mubr.bf16.mxu0 0
    %815 = vmatmul.mubr.bf16.gmra.mrb[0].mxu0 %v651
    %v816 = vpop.f32.mrb[0].mxu0
    %v817 = vadd.f32 0.0, %v816
    %v818 = vpop.f32.mrb[0].mxu0
    %v819 = vadd.f32 0.0, %v818
    %v820 = vpop.f32.mrb[0].mxu0
    %v821 = vadd.f32 0.0, %v820
    %v822 = vpop.f32.mrb[0].mxu0
    %v823 = vadd.f32 0.0, %v822
    %824 = vmatprep.mubr.bf16.mxu0 0
    %825 = vmatmul.mubr.bf16.gmra.mrb[0].mxu0 %v652
    %v826 = vpop.f32.mrb[0].mxu0
    %v827 = vadd.f32 0.0, %v826
    %v828 = vpop.f32.mrb[0].mxu0
    %v829 = vadd.f32 0.0, %v828
    %v830 = vpop.f32.mrb[0].mxu0
    %v831 = vadd.f32 0.0, %v830
    %v832 = vpop.f32.mrb[0].mxu0
    %v833 = vadd.f32 0.0, %v832
    %834 = vmatprep.mubr.bf16.mxu0 0
    %835 = vmatmul.mubr.bf16.gmra.mrb[0].mxu0 %v653
    %v836 = vpop.f32.mrb[0].mxu0
    %v837 = vadd.f32 0.0, %v836
    %v838 = vpop.f32.mrb[0].mxu0
    %v839 = vadd.f32 0.0, %v838
    %v840 = vpop.f32.mrb[0].mxu0
    %v841 = vadd.f32 0.0, %v840
    %v842 = vpop.f32.mrb[0].mxu0
    %v843 = vadd.f32 0.0, %v842
    %844 = vmatprep.mubr.bf16.mxu0 0
    %845 = vmatmul.mubr.bf16.gmra.mrb[0].mxu0 %v654
    %v846 = vpop.f32.mrb[0].mxu0
    %v847 = vadd.f32 0.0, %v846
    %v848 = vpop.f32.mrb[0].mxu0
    %v849 = vadd.f32 0.0, %v848
    %v850 = vpop.f32.mrb[0].mxu0
    %v851 = vadd.f32 0.0, %v850
    %v852 = vpop.f32.mrb[0].mxu0
    %v853 = vadd.f32 0.0, %v852
    %854 = vmatprep.mubr.bf16.mxu0 0
    %855 = vmatmul.mubr.bf16.gmra.mrb[0].mxu0 %v655
    %v856 = vpop.f32.mrb[0].mxu0
    %v857 = vadd.f32 0.0, %v856
    %v858 = vpop.f32.mrb[0].mxu0
    %v859 = vadd.f32 0.0, %v858
    %v860 = vpop.f32.mrb[0].mxu0
    %v861 = vadd.f32 0.0, %v860
    %v862 = vpop.f32.mrb[0].mxu0
    %v863 = vadd.f32 0.0, %v862
    %864 = vdwg.mxu0
    %v865 = vpack.c.bf16 %v791, %v787
    %v866 = vpack.c.bf16 %v793, %v789
    %v867 = vpack.c.bf16 %v801, %v797
    %v868 = vpack.c.bf16 %v803, %v799
    %v869 = vpack.c.bf16 %v811, %v807
    %v870 = vpack.c.bf16 %v813, %v809
    %v871 = vpack.c.bf16 %v821, %v817
    %v872 = vpack.c.bf16 %v823, %v819
    %v873 = vpack.c.bf16 %v831, %v827
    %v874 = vpack.c.bf16 %v833, %v829
    %v875 = vpack.c.bf16 %v841, %v837
    %v876 = vpack.c.bf16 %v843, %v839
    %v877 = vpack.c.bf16 %v851, %v847
    %v878 = vpack.c.bf16 %v853, %v849
    %v879 = vpack.c.bf16 %v861, %v857
    %v880 = vpack.c.bf16 %v863, %v859
    %v897 = vunpack.c.l.b16 %v865
    %v898 = vunpack.c.l.b16 %v866
    %v899 = vunpack.c.h.b16 %v865
    %v900 = vunpack.c.h.b16 %v866
    %v901 = vunpack.c.l.b16 %v867
    %v902 = vunpack.c.l.b16 %v868
    %v903 = vunpack.c.h.b16 %v867
    %v904 = vunpack.c.h.b16 %v868
    %v905 = vunpack.c.l.b16 %v869
    %v906 = vunpack.c.l.b16 %v870
    %v907 = vunpack.c.h.b16 %v869
    %v908 = vunpack.c.h.b16 %v870
    %v909 = vunpack.c.l.b16 %v871
    %v910 = vunpack.c.l.b16 %v872
    %v911 = vunpack.c.h.b16 %v871
    %v912 = vunpack.c.h.b16 %v872
    %v913 = vunpack.c.l.b16 %v873
    %v914 = vunpack.c.l.b16 %v874
    %v915 = vunpack.c.h.b16 %v873
    %v916 = vunpack.c.h.b16 %v874
    %v917 = vunpack.c.l.b16 %v875
    %v918 = vunpack.c.l.b16 %v876
    %v919 = vunpack.c.h.b16 %v875
    %v920 = vunpack.c.h.b16 %v876
    %v921 = vunpack.c.l.b16 %v877
    %v922 = vunpack.c.l.b16 %v878
    %v923 = vunpack.c.h.b16 %v877
    %v924 = vunpack.c.h.b16 %v878
    %v925 = vunpack.c.l.b16 %v879
    %v926 = vunpack.c.l.b16 %v880
    %v927 = vunpack.c.h.b16 %v879
    %v928 = vunpack.c.h.b16 %v880
    %v929 = vpack.c.b16 %v898, %v897
    %v930 = vpack.c.b16 %v900, %v899
    %v931 = vpack.c.b16 %v902, %v901
    %v932 = vpack.c.b16 %v904, %v903
    %v933 = vpack.c.b16 %v906, %v905
    %v934 = vpack.c.b16 %v908, %v907
    %v935 = vpack.c.b16 %v910, %v909
    %v936 = vpack.c.b16 %v912, %v911
    %v937 = vpack.c.b16 %v914, %v913
    %v938 = vpack.c.b16 %v916, %v915
    %v939 = vpack.c.b16 %v918, %v917
    %v940 = vpack.c.b16 %v920, %v919
    %v941 = vpack.c.b16 %v922, %v921
    %v942 = vpack.c.b16 %v924, %v923
    %v943 = vpack.c.b16 %v926, %v925
    %v944 = vpack.c.b16 %v928, %v927
    %961 = vst [vmem:[%s5] sm:$0xff] %v929
    %962 = vst [vmem:[%s5 + $0x8] sm:$0xff] %v930
    %963 = vst [vmem:[%s5 + $0x10] sm:$0xff] %v931
    %964 = vst [vmem:[%s5 + $0x18] sm:$0xff] %v932
    %965 = vst [vmem:[%s5 + $0x20] sm:$0xff] %v933
    %966 = vst [vmem:[%s5 + $0x28] sm:$0xff] %v934
    %967 = vst [vmem:[%s5 + $0x30] sm:$0xff] %v935
    %968 = vst [vmem:[%s5 + $0x38] sm:$0xff] %v936
    %969 = vst [vmem:[%s5 + $0x40] sm:$0xff] %v937
    %970 = vst [vmem:[%s5 + $0x48] sm:$0xff] %v938
    %971 = vst [vmem:[%s5 + $0x50] sm:$0xff] %v939
    %972 = vst [vmem:[%s5 + $0x58] sm:$0xff] %v940
    %973 = vst [vmem:[%s5 + $0x60] sm:$0xff] %v941
    %974 = vst [vmem:[%s5 + $0x68] sm:$0xff] %v942
    %975 = vst [vmem:[%s5 + $0x70] sm:$0xff] %v943
    %976 = vst [vmem:[%s5 + $0x78] sm:$0xff] %v944
    // Predicated region
    $region104: #{graphsage2_forward_padded.4} parent=1 // pred_check
      _
    $region105: #{graphsage2_forward_padded.4} parent=1 // pred_check_branch
      %978 = sbr.rel (0) target = $region107
    $region106: #{graphsage2_forward_padded.4} parent=1 // pred_region
      _
    $region107: #{graphsage2_forward_padded.4} parent=1 // pred_fallthru
      _
    // Predicated region
    $region108: #{graphsage2_forward_padded.4} parent=1 // pred_check
      _
    $region109: #{graphsage2_forward_padded.4} parent=1 // pred_check_branch
      %980 = sbr.rel (0) target = $region111
    $region110: #{graphsage2_forward_padded.4} parent=1 // pred_region
      _
    $region111: #{graphsage2_forward_padded.4} parent=1 // pred_fallthru
      _

</llo_original>
